<compile_context>
chip_gen: v7x
topology: tpu7x:2x2x1
jax: 0.10.0
libtpu: 0.0.40
codegen_flags: <defaults>
</compile_context>

<pallas_src>
import functools

import jax
import jax.numpy as jnp
from jax.experimental import pallas as pl
from jax.experimental.pallas import tpu as pltpu

K = 7      # kernel_size
PAD = 3    # padding for kernel_size=7


def _spatial_attention_kernel(w_ref, x_ref, col_ref, row_ref, o_ref,
                              sum_ref, max_ref, *, H, W, C, BC):
    """Grid = (batch blocks, channel blocks); channel axis is the reduction axis.

    w_ref  : SMEM (2*K*K,) f32     flattened conv weight [avg taps..., max taps...]
    x_ref  : VMEM (BN, BC, H*W)    native-dtype lane-dense input block
    col_ref: VMEM (1, H*W) int32   precomputed column index of each flat pixel
    row_ref: VMEM (1, H*W) int32   precomputed row index of each flat pixel
    o_ref  : VMEM (BN, 1, H*W)     lane-dense output block (input dtype)
    sum_ref: VMEM (BN, H*W) f32    running channel sum (scratch)
    max_ref: VMEM (BN, H*W) f32    running channel max (scratch)
    """
    BN, _, HW = x_ref.shape
    c_idx = pl.program_id(1)
    nc = pl.num_programs(1)
    rem = C % BC            # static: nonzero only if the last channel block is partial

    # ---- fused single-pass channel reduction over this channel block --------
    if BC % 8 == 0:
        n_slabs = BC // 8
        if rem != 0:
            # number of valid channels in the current block (traced scalar)
            limit = jnp.where(c_idx == nc - 1, rem, BC)

        def slab(g):
            if isinstance(g, int):
                xg = x_ref[:, g * 8:(g + 1) * 8, :].astype(jnp.float32)
            else:
                off = pl.multiple_of(g * 8, 8)
                xg = x_ref[:, pl.ds(off, 8), :].astype(jnp.float32)
            if rem != 0:
                local = g * 8 + jax.lax.broadcasted_iota(jnp.int32, (1, 8, 1), 1)
                valid = local < limit
                return (jnp.where(valid, xg, 0.0),
                        jnp.where(valid, xg, -jnp.inf))
            return xg, xg

        psum, pmax = slab(0)
        if n_slabs <= 8:
            # Small block: static unroll.
            for g in range(1, n_slabs):
                xs, xm = slab(g)
                psum = psum + xs
                pmax = jnp.maximum(pmax, xm)
        else:
            # Big block: rolled loop keeps the VLIW program small; the loop is
            # DMA-bound anyway. Modest unroll keeps LLO scheduling visibility.
            def body(g, carry):
                ps, pm = carry
                xs, xm = slab(g)
                return ps + xs, jnp.maximum(pm, xm)
            psum, pmax = jax.lax.fori_loop(1, n_slabs, body, (psum, pmax),
                                           unroll=8)
        blk_sum = jnp.sum(psum, axis=1)
        blk_max = jnp.max(pmax, axis=1)
    else:
        # BC == C (small / non-multiple-of-8 channel count): whole block at once.
        xb = x_ref[...].astype(jnp.float32)
        blk_sum = jnp.sum(xb, axis=1)
        blk_max = jnp.max(xb, axis=1)

    @pl.when(c_idx == 0)
    def _():
        sum_ref[...] = blk_sum
        max_ref[...] = blk_max

    @pl.when(c_idx != 0)
    def _():
        sum_ref[...] = sum_ref[...] + blk_sum
        max_ref[...] = jnp.maximum(max_ref[...], blk_max)

    # ---- finalize on the last channel block: 7x7 conv + sigmoid -------------
    @pl.when(c_idx == nc - 1)
    def _():
        avg = sum_ref[...] * jnp.float32(1.0 / C)   # (BN, HW)  mean = sum * (1/C)
        mx = max_ref[...]                           # (BN, HW)
        col = col_ref[...]                          # (1, HW) int32
        row = row_ref[...]                          # (1, HW) int32

        # dx outer: only two column-shifted maps live at a time; accumulate
        # into 7 per-dy partial sums. Column shift = XLU lane rotation + mask
        # (mask realizes the conv's zero padding; the circular wrap is masked).
        r = [None] * K
        for dx in range(K):
            s = PAD - dx
            if s == 0:
                a_dx, m_dx = avg, mx
            else:
                cmask = (col >= s) & (col < W + s)
                a_dx = jnp.where(cmask, pltpu.roll(avg, s % HW, 1), 0.0)
                m_dx = jnp.where(cmask, pltpu.roll(mx, s % HW, 1), 0.0)
            for dy in range(K):
                wa = w_ref[dy * K + dx]            # avg-channel tap (SMEM scalar)
                wm = w_ref[K * K + dy * K + dx]    # max-channel tap (SMEM scalar)
                t = wa * a_dx + wm * m_dx
                r[dy] = t if r[dy] is None else r[dy] + t

        # Row shift: a single lane rotation by dy*W per dy, out-of-image rows
        # masked to zero.
        acc = None
        for dy in range(K):
            s = PAD - dy
            if s == 0:
                term = r[dy]
            else:
                rmask = (row >= s) & (row < H + s)
                term = jnp.where(rmask, pltpu.roll(r[dy], (s * W) % HW, 1), 0.0)
            acc = term if acc is None else acc + term

        o_ref[:, 0, :] = jax.nn.sigmoid(acc).astype(o_ref.dtype)


def spatial_attention(x, weight, *, c_block=None):
    """x: (N, C, H, W) any float dtype, weight: (1, 2, K, K) -> (N, 1, H, W) in x.dtype."""
    N, C, H, W = x.shape
    HW = H * W
    itemsize = jnp.dtype(x.dtype).itemsize

    x_flat = jnp.reshape(x, (N, C, HW))                      # free (NCHW contiguous)
    w_flat = jnp.reshape(weight.astype(jnp.float32), (-1,))  # (2*K*K,) -> SMEM
    flat = jnp.arange(HW, dtype=jnp.int32)
    col_ids = jnp.reshape(flat % W, (1, HW))                 # precomputed mask planes
    row_ids = jnp.reshape(flat // W, (1, HW))

    # --- batch block: up to a full sublane tile (8), but keep >= 2 batch
    # blocks whenever N > 1 so the "parallel" axis can shard across the two
    # v7x TensorCores; cap BN for very large H*W to bound finalize temporaries.
    if N == 1:
        BN = 1
    else:
        BN = min(8, (N + 1) // 2)
    while BN > 1 and BN * HW * 4 > (2 << 20):
        BN = max(1, BN // 2)

    # --- channel block: ~8 MiB of input per block (double-buffered ~16 MiB),
    # always a bounded multiple of 8; a partial tail block is masked in-kernel.
    if c_block is not None:
        BC = min(int(c_block), C)
        assert BC == C or BC % 8 == 0, "c_block must be a multiple of 8 (or >= C)"
    else:
        budget = 8 * 1024 * 1024
        max_bc = budget // max(1, BN * HW * itemsize)
        max_bc = max(8, (max_bc // 8) * 8)
        if C <= max_bc:
            BC = C
        else:
            nblk = -(-C // max_bc)                 # cdiv: number of channel blocks
            BC = ((-(-C // nblk)) + 7) // 8 * 8    # balanced block, multiple of 8

    grid = (pl.cdiv(N, BN), pl.cdiv(C, BC))
    kernel = functools.partial(_spatial_attention_kernel, H=H, W=W, C=C, BC=BC)

    out_flat = pl.pallas_call(
        kernel,
        out_shape=jax.ShapeDtypeStruct((N, 1, HW), x.dtype),
        grid_spec=pltpu.PrefetchScalarGridSpec(
            num_scalar_prefetch=1,                  # conv weight -> SMEM
            grid=grid,
            in_specs=[
                pl.BlockSpec((BN, BC, HW), lambda b, c, w: (b, c, 0)),
                pl.BlockSpec((1, HW), lambda b, c, w: (0, 0)),   # col ids (resident)
                pl.BlockSpec((1, HW), lambda b, c, w: (0, 0)),   # row ids (resident)
            ],
            out_specs=pl.BlockSpec((BN, 1, HW), lambda b, c, w: (b, 0, 0)),
            scratch_shapes=[
                pltpu.VMEM((BN, HW), jnp.float32),  # running channel sum
                pltpu.VMEM((BN, HW), jnp.float32),  # running channel max
            ],
        ),
        compiler_params=pltpu.CompilerParams(
            dimension_semantics=("parallel", "arbitrary"),
            vmem_limit_bytes=48 * 1024 * 1024,      # > scoped defaults, <= v7x 64 MiB
        ),
    )(w_flat, x_flat, col_ids, row_ids)

    return jnp.reshape(out_flat, (N, 1, H, W))


def spatial_attention_reference(x, weight):
    """Pure-JAX reference matching the PyTorch forward (f32)."""
    avg = jnp.mean(x, axis=1, keepdims=True)
    mx = jnp.max(x, axis=1, keepdims=True)
    cat = jnp.concatenate([avg, mx], axis=1)
    y = jax.lax.conv_general_dilated(
        cat, weight, window_strides=(1, 1),
        padding=[(PAD, PAD), (PAD, PAD)],
        dimension_numbers=('NCHW', 'OIHW', 'NCHW'))
    return jax.nn.sigmoid(y)


if __name__ == "__main__":
    key = jax.random.PRNGKey(0)
    kw, k1, k2, k3, k4 = jax.random.split(key, 5)

    # Deterministic conv weight (PyTorch Conv2d shape (out=1, in=2, 7, 7)),
    # kaiming-uniform-style bound = 1/sqrt(fan_in).
    fan_in = 2 * K * K
    bound = 1.0 / (fan_in ** 0.5)
    weight = jax.random.uniform(kw, (1, 2, K, K), jnp.float32,
                                minval=-bound, maxval=bound)

    def check(x, out, atol, rtol, name):
        ref = spatial_attention_reference(x.astype(jnp.float32), weight)
        assert out.shape == ref.shape, f"shape mismatch ({name})"
        assert jnp.allclose(out.astype(jnp.float32), ref, atol=atol, rtol=rtol), \
            f"mismatch vs reference ({name})"

    # Test 1: module-consistent small shape; single channel block per batch block.
    x1 = jax.random.normal(k1, (2, 4, 16, 16), jnp.float32)
    out1 = jax.block_until_ready(spatial_attention(x1, weight))
    check(x1, out1, 1e-4, 1e-4, "test1")

    # Test 2: multi channel-block accumulator path (two channel blocks).
    x2 = jax.random.normal(k2, (2, 16, 16, 16), jnp.float32)
    out2 = jax.block_until_ready(spatial_attention(x2, weight, c_block=8))
    check(x2, out2, 1e-4, 1e-4, "test2")

    # Test 3: bf16 input streamed in native dtype, rolled fori reduction
    # (10 slabs), partial batch tail block (N=3, BN=2).
    x3 = jax.random.normal(k3, (3, 80, 8, 16), jnp.float32).astype(jnp.bfloat16)
    out3 = jax.block_until_ready(spatial_attention(x3, weight))
    check(x3, out3, 2e-2, 2e-2, "test3")

    # Test 4: channel count not divisible by the block -> masked tail channel block.
    x4 = jax.random.normal(k4, (2, 20, 16, 16), jnp.float32)
    out4 = jax.block_until_ready(spatial_attention(x4, weight, c_block=16))
    check(x4, out4, 1e-4, 1e-4, "test4")

    print("KERNEL_OK")
</pallas_src>

<mosaic_0001>
module attributes {stable_mosaic.version = 11 : i64} {
  func.func @_spatial_attention_kernel(%arg0: i32, %arg1: i32, %arg2: memref<98xf32, #tpu.memory_space<smem>>, %arg3: memref<1x4x256xf32, #tpu.memory_space<vmem>>, %arg4: memref<1x256xi32, #tpu.memory_space<vmem>>, %arg5: memref<1x256xi32, #tpu.memory_space<vmem>>, %arg6: memref<1x1x256xf32, #tpu.memory_space<vmem>>, %arg7: memref<1x256xf32, #tpu.memory_space<vmem>>, %arg8: memref<1x256xf32, #tpu.memory_space<vmem>>) attributes {dimension_semantics = [#tpu.dimension_semantics<parallel>, #tpu.dimension_semantics<arbitrary>], iteration_bounds = array<i64: 2, 1>, scalar_prefetch = 1 : i64, scratch_operands = 2 : i64, tpu.core_type = #tpu.core_type<tc>, window_params = [{transform_indices = @transform_0, window_bounds = array<i64: 1, 4, 256>}, {pipeline_mode = #tpu.pipeline_mode<synchronous>, transform_indices = @transform_1, window_bounds = array<i64: 1, 256>}, {pipeline_mode = #tpu.pipeline_mode<synchronous>, transform_indices = @transform_2, window_bounds = array<i64: 1, 256>}, {transform_indices = @transform_3, window_bounds = array<i64: 1, 1, 256>}]} {
    %c0 = arith.constant 0 : index
    %c0_0 = arith.constant 0 : index
    %c0_1 = arith.constant 0 : index
    %0 = vector.load %arg3[%c0, %c0_0, %c0_1] : memref<1x4x256xf32, #tpu.memory_space<vmem>>, vector<1x4x256xf32>
    %cst = arith.constant dense<0.000000e+00> : vector<1x256xf32>
    %1 = vector.multi_reduction <add>, %0, %cst [1] : vector<1x4x256xf32> to vector<1x256xf32>
    %cst_2 = arith.constant dense<0xFF800000> : vector<1x256xf32>
    %2 = vector.multi_reduction <maximumf>, %0, %cst_2 [1] : vector<1x4x256xf32> to vector<1x256xf32>
    %c0_i32 = arith.constant 0 : i32
    %3 = arith.cmpi eq, %arg1, %c0_i32 : i32
    %4 = arith.extui %3 : i1 to i32
    %c0_i32_3 = arith.constant 0 : i32
    %5 = arith.cmpi ne, %4, %c0_i32_3 : i32
    scf.if %5 {
      %c0_8 = arith.constant 0 : index
      %c0_9 = arith.constant 0 : index
      %12 = vector.load %arg7[%c0_8, %c0_9] : memref<1x256xf32, #tpu.memory_space<vmem>>, vector<1x256xf32>
      tpu.vector_store %arg7[%c0_8, %c0_9], %1 {strides = array<i32>} : memref<1x256xf32, #tpu.memory_space<vmem>>, vector<1x256xf32>,
      %c0_10 = arith.constant 0 : index
      %c0_11 = arith.constant 0 : index
      %13 = vector.load %arg8[%c0_10, %c0_11] : memref<1x256xf32, #tpu.memory_space<vmem>>, vector<1x256xf32>
      tpu.vector_store %arg8[%c0_10, %c0_11], %2 {strides = array<i32>} : memref<1x256xf32, #tpu.memory_space<vmem>>, vector<1x256xf32>,
    } else {
    }
    %c0_i32_4 = arith.constant 0 : i32
    %6 = arith.cmpi ne, %arg1, %c0_i32_4 : i32
    %7 = arith.extui %6 : i1 to i32
    %c0_i32_5 = arith.constant 0 : i32
    %8 = arith.cmpi ne, %7, %c0_i32_5 : i32
    scf.if %8 {
      %c0_8 = arith.constant 0 : index
      %c0_9 = arith.constant 0 : index
      %12 = vector.load %arg7[%c0_8, %c0_9] : memref<1x256xf32, #tpu.memory_space<vmem>>, vector<1x256xf32>
      %13 = arith.addf %12, %1 : vector<1x256xf32>
      %c0_10 = arith.constant 0 : index
      %c0_11 = arith.constant 0 : index
      %14 = vector.load %arg7[%c0_10, %c0_11] : memref<1x256xf32, #tpu.memory_space<vmem>>, vector<1x256xf32>
      tpu.vector_store %arg7[%c0_10, %c0_11], %13 {strides = array<i32>} : memref<1x256xf32, #tpu.memory_space<vmem>>, vector<1x256xf32>,
      %c0_12 = arith.constant 0 : index
      %c0_13 = arith.constant 0 : index
      %15 = vector.load %arg8[%c0_12, %c0_13] : memref<1x256xf32, #tpu.memory_space<vmem>>, vector<1x256xf32>
      %16 = arith.maximumf %15, %2 : vector<1x256xf32>
      %c0_14 = arith.constant 0 : index
      %c0_15 = arith.constant 0 : index
      %17 = vector.load %arg8[%c0_14, %c0_15] : memref<1x256xf32, #tpu.memory_space<vmem>>, vector<1x256xf32>
      tpu.vector_store %arg8[%c0_14, %c0_15], %16 {strides = array<i32>} : memref<1x256xf32, #tpu.memory_space<vmem>>, vector<1x256xf32>,
    } else {
    }
    %c0_i32_6 = arith.constant 0 : i32
    %9 = arith.cmpi eq, %arg1, %c0_i32_6 : i32
    %10 = arith.extui %9 : i1 to i32
    %c0_i32_7 = arith.constant 0 : i32
    %11 = arith.cmpi ne, %10, %c0_i32_7 : i32
    scf.if %11 {
      %c0_8 = arith.constant 0 : index
      %c0_9 = arith.constant 0 : index
      %12 = vector.load %arg7[%c0_8, %c0_9] : memref<1x256xf32, #tpu.memory_space<vmem>>, vector<1x256xf32>
      %cst_10 = arith.constant 2.500000e-01 : f32
      %13 = vector.broadcast %cst_10 : f32 to vector<1x256xf32>
      %14 = arith.mulf %12, %13 : vector<1x256xf32>
      %c0_11 = arith.constant 0 : index
      %c0_12 = arith.constant 0 : index
      %15 = vector.load %arg8[%c0_11, %c0_12] : memref<1x256xf32, #tpu.memory_space<vmem>>, vector<1x256xf32>
      %c0_13 = arith.constant 0 : index
      %c0_14 = arith.constant 0 : index
      %16 = vector.load %arg4[%c0_13, %c0_14] : memref<1x256xi32, #tpu.memory_space<vmem>>, vector<1x256xi32>
      %c0_15 = arith.constant 0 : index
      %c0_16 = arith.constant 0 : index
      %17 = vector.load %arg5[%c0_15, %c0_16] : memref<1x256xi32, #tpu.memory_space<vmem>>, vector<1x256xi32>
      %c3_i32 = arith.constant 3 : i32
      %18 = vector.broadcast %c3_i32 : i32 to vector<1x256xi32>
      %19 = arith.cmpi sge, %16, %18 : vector<1x256xi32>
      %c19_i32 = arith.constant 19 : i32
      %20 = vector.broadcast %c19_i32 : i32 to vector<1x256xi32>
      %21 = arith.cmpi slt, %16, %20 : vector<1x256xi32>
      %22 = arith.andi %19, %21 : vector<1x256xi1>
      %c3_i32_17 = arith.constant 3 : i32
      %23 = tpu.dynamic_rotate %14 by %c3_i32_17 dim 1 : vector<1x256xf32>, i32 -> vector<1x256xf32>
      %cst_18 = arith.constant 0.000000e+00 : f32
      %24 = vector.broadcast %cst_18 : f32 to vector<1x256xf32>
      %25 = arith.select %22, %23, %24 : vector<1x256xi1>, vector<1x256xf32>
      %c3_i32_19 = arith.constant 3 : i32
      %26 = tpu.dynamic_rotate %15 by %c3_i32_19 dim 1 : vector<1x256xf32>, i32 -> vector<1x256xf32>
      %cst_20 = arith.constant 0.000000e+00 : f32
      %27 = vector.broadcast %cst_20 : f32 to vector<1x256xf32>
      %28 = arith.select %22, %26, %27 : vector<1x256xi1>, vector<1x256xf32>
      %c0_21 = arith.constant 0 : index
      %29 = memref.load %arg2[%c0_21] : memref<98xf32, #tpu.memory_space<smem>>
      %c49 = arith.constant 49 : index
      %30 = memref.load %arg2[%c49] : memref<98xf32, #tpu.memory_space<smem>>
      %31 = vector.broadcast %29 : f32 to vector<1x256xf32>
      %32 = arith.mulf %31, %25 : vector<1x256xf32>
      %33 = vector.broadcast %30 : f32 to vector<1x256xf32>
      %34 = arith.mulf %33, %28 : vector<1x256xf32>
      %35 = arith.addf %32, %34 : vector<1x256xf32>
      %c7 = arith.constant 7 : index
      %36 = memref.load %arg2[%c7] : memref<98xf32, #tpu.memory_space<smem>>
      %c56 = arith.constant 56 : index
      %37 = memref.load %arg2[%c56] : memref<98xf32, #tpu.memory_space<smem>>
      %38 = vector.broadcast %36 : f32 to vector<1x256xf32>
      %39 = arith.mulf %38, %25 : vector<1x256xf32>
      %40 = vector.broadcast %37 : f32 to vector<1x256xf32>
      %41 = arith.mulf %40, %28 : vector<1x256xf32>
      %42 = arith.addf %39, %41 : vector<1x256xf32>
      %c14 = arith.constant 14 : index
      %43 = memref.load %arg2[%c14] : memref<98xf32, #tpu.memory_space<smem>>
      %c63 = arith.constant 63 : index
      %44 = memref.load %arg2[%c63] : memref<98xf32, #tpu.memory_space<smem>>
      %45 = vector.broadcast %43 : f32 to vector<1x256xf32>
      %46 = arith.mulf %45, %25 : vector<1x256xf32>
      %47 = vector.broadcast %44 : f32 to vector<1x256xf32>
      %48 = arith.mulf %47, %28 : vector<1x256xf32>
      %49 = arith.addf %46, %48 : vector<1x256xf32>
      %c21 = arith.constant 21 : index
      %50 = memref.load %arg2[%c21] : memref<98xf32, #tpu.memory_space<smem>>
      %c70 = arith.constant 70 : index
      %51 = memref.load %arg2[%c70] : memref<98xf32, #tpu.memory_space<smem>>
      %52 = vector.broadcast %50 : f32 to vector<1x256xf32>
      %53 = arith.mulf %52, %25 : vector<1x256xf32>
      %54 = vector.broadcast %51 : f32 to vector<1x256xf32>
      %55 = arith.mulf %54, %28 : vector<1x256xf32>
      %56 = arith.addf %53, %55 : vector<1x256xf32>
      %c28 = arith.constant 28 : index
      %57 = memref.load %arg2[%c28] : memref<98xf32, #tpu.memory_space<smem>>
      %c77 = arith.constant 77 : index
      %58 = memref.load %arg2[%c77] : memref<98xf32, #tpu.memory_space<smem>>
      %59 = vector.broadcast %57 : f32 to vector<1x256xf32>
      %60 = arith.mulf %59, %25 : vector<1x256xf32>
      %61 = vector.broadcast %58 : f32 to vector<1x256xf32>
      %62 = arith.mulf %61, %28 : vector<1x256xf32>
      %63 = arith.addf %60, %62 : vector<1x256xf32>
      %c35 = arith.constant 35 : index
      %64 = memref.load %arg2[%c35] : memref<98xf32, #tpu.memory_space<smem>>
      %c84 = arith.constant 84 : index
      %65 = memref.load %arg2[%c84] : memref<98xf32, #tpu.memory_space<smem>>
      %66 = vector.broadcast %64 : f32 to vector<1x256xf32>
      %67 = arith.mulf %66, %25 : vector<1x256xf32>
      %68 = vector.broadcast %65 : f32 to vector<1x256xf32>
      %69 = arith.mulf %68, %28 : vector<1x256xf32>
      %70 = arith.addf %67, %69 : vector<1x256xf32>
      %c42 = arith.constant 42 : index
      %71 = memref.load %arg2[%c42] : memref<98xf32, #tpu.memory_space<smem>>
      %c91 = arith.constant 91 : index
      %72 = memref.load %arg2[%c91] : memref<98xf32, #tpu.memory_space<smem>>
      %73 = vector.broadcast %71 : f32 to vector<1x256xf32>
      %74 = arith.mulf %73, %25 : vector<1x256xf32>
      %75 = vector.broadcast %72 : f32 to vector<1x256xf32>
      %76 = arith.mulf %75, %28 : vector<1x256xf32>
      %77 = arith.addf %74, %76 : vector<1x256xf32>
      %c2_i32 = arith.constant 2 : i32
      %78 = vector.broadcast %c2_i32 : i32 to vector<1x256xi32>
      %79 = arith.cmpi sge, %16, %78 : vector<1x256xi32>
      %c18_i32 = arith.constant 18 : i32
      %80 = vector.broadcast %c18_i32 : i32 to vector<1x256xi32>
      %81 = arith.cmpi slt, %16, %80 : vector<1x256xi32>
      %82 = arith.andi %79, %81 : vector<1x256xi1>
      %c2_i32_22 = arith.constant 2 : i32
      %83 = tpu.dynamic_rotate %14 by %c2_i32_22 dim 1 : vector<1x256xf32>, i32 -> vector<1x256xf32>
      %cst_23 = arith.constant 0.000000e+00 : f32
      %84 = vector.broadcast %cst_23 : f32 to vector<1x256xf32>
      %85 = arith.select %82, %83, %84 : vector<1x256xi1>, vector<1x256xf32>
      %c2_i32_24 = arith.constant 2 : i32
      %86 = tpu.dynamic_rotate %15 by %c2_i32_24 dim 1 : vector<1x256xf32>, i32 -> vector<1x256xf32>
      %cst_25 = arith.constant 0.000000e+00 : f32
      %87 = vector.broadcast %cst_25 : f32 to vector<1x256xf32>
      %88 = arith.select %82, %86, %87 : vector<1x256xi1>, vector<1x256xf32>
      %c1 = arith.constant 1 : index
      %89 = memref.load %arg2[%c1] : memref<98xf32, #tpu.memory_space<smem>>
      %c50 = arith.constant 50 : index
      %90 = memref.load %arg2[%c50] : memref<98xf32, #tpu.memory_space<smem>>
      %91 = vector.broadcast %89 : f32 to vector<1x256xf32>
      %92 = arith.mulf %91, %85 : vector<1x256xf32>
      %93 = vector.broadcast %90 : f32 to vector<1x256xf32>
      %94 = arith.mulf %93, %88 : vector<1x256xf32>
      %95 = arith.addf %92, %94 : vector<1x256xf32>
      %96 = arith.addf %35, %95 : vector<1x256xf32>
      %c8 = arith.constant 8 : index
      %97 = memref.load %arg2[%c8] : memref<98xf32, #tpu.memory_space<smem>>
      %c57 = arith.constant 57 : index
      %98 = memref.load %arg2[%c57] : memref<98xf32, #tpu.memory_space<smem>>
      %99 = vector.broadcast %97 : f32 to vector<1x256xf32>
      %100 = arith.mulf %99, %85 : vector<1x256xf32>
      %101 = vector.broadcast %98 : f32 to vector<1x256xf32>
      %102 = arith.mulf %101, %88 : vector<1x256xf32>
      %103 = arith.addf %100, %102 : vector<1x256xf32>
      %104 = arith.addf %42, %103 : vector<1x256xf32>
      %c15 = arith.constant 15 : index
      %105 = memref.load %arg2[%c15] : memref<98xf32, #tpu.memory_space<smem>>
      %c64 = arith.constant 64 : index
      %106 = memref.load %arg2[%c64] : memref<98xf32, #tpu.memory_space<smem>>
      %107 = vector.broadcast %105 : f32 to vector<1x256xf32>
      %108 = arith.mulf %107, %85 : vector<1x256xf32>
      %109 = vector.broadcast %106 : f32 to vector<1x256xf32>
      %110 = arith.mulf %109, %88 : vector<1x256xf32>
      %111 = arith.addf %108, %110 : vector<1x256xf32>
      %112 = arith.addf %49, %111 : vector<1x256xf32>
      %c22 = arith.constant 22 : index
      %113 = memref.load %arg2[%c22] : memref<98xf32, #tpu.memory_space<smem>>
      %c71 = arith.constant 71 : index
      %114 = memref.load %arg2[%c71] : memref<98xf32, #tpu.memory_space<smem>>
      %115 = vector.broadcast %113 : f32 to vector<1x256xf32>
      %116 = arith.mulf %115, %85 : vector<1x256xf32>
      %117 = vector.broadcast %114 : f32 to vector<1x256xf32>
      %118 = arith.mulf %117, %88 : vector<1x256xf32>
      %119 = arith.addf %116, %118 : vector<1x256xf32>
      %120 = arith.addf %56, %119 : vector<1x256xf32>
      %c29 = arith.constant 29 : index
      %121 = memref.load %arg2[%c29] : memref<98xf32, #tpu.memory_space<smem>>
      %c78 = arith.constant 78 : index
      %122 = memref.load %arg2[%c78] : memref<98xf32, #tpu.memory_space<smem>>
      %123 = vector.broadcast %121 : f32 to vector<1x256xf32>
      %124 = arith.mulf %123, %85 : vector<1x256xf32>
      %125 = vector.broadcast %122 : f32 to vector<1x256xf32>
      %126 = arith.mulf %125, %88 : vector<1x256xf32>
      %127 = arith.addf %124, %126 : vector<1x256xf32>
      %128 = arith.addf %63, %127 : vector<1x256xf32>
      %c36 = arith.constant 36 : index
      %129 = memref.load %arg2[%c36] : memref<98xf32, #tpu.memory_space<smem>>
      %c85 = arith.constant 85 : index
      %130 = memref.load %arg2[%c85] : memref<98xf32, #tpu.memory_space<smem>>
      %131 = vector.broadcast %129 : f32 to vector<1x256xf32>
      %132 = arith.mulf %131, %85 : vector<1x256xf32>
      %133 = vector.broadcast %130 : f32 to vector<1x256xf32>
      %134 = arith.mulf %133, %88 : vector<1x256xf32>
      %135 = arith.addf %132, %134 : vector<1x256xf32>
      %136 = arith.addf %70, %135 : vector<1x256xf32>
      %c43 = arith.constant 43 : index
      %137 = memref.load %arg2[%c43] : memref<98xf32, #tpu.memory_space<smem>>
      %c92 = arith.constant 92 : index
      %138 = memref.load %arg2[%c92] : memref<98xf32, #tpu.memory_space<smem>>
      %139 = vector.broadcast %137 : f32 to vector<1x256xf32>
      %140 = arith.mulf %139, %85 : vector<1x256xf32>
      %141 = vector.broadcast %138 : f32 to vector<1x256xf32>
      %142 = arith.mulf %141, %88 : vector<1x256xf32>
      %143 = arith.addf %140, %142 : vector<1x256xf32>
      %144 = arith.addf %77, %143 : vector<1x256xf32>
      %c1_i32 = arith.constant 1 : i32
      %145 = vector.broadcast %c1_i32 : i32 to vector<1x256xi32>
      %146 = arith.cmpi sge, %16, %145 : vector<1x256xi32>
      %c17_i32 = arith.constant 17 : i32
      %147 = vector.broadcast %c17_i32 : i32 to vector<1x256xi32>
      %148 = arith.cmpi slt, %16, %147 : vector<1x256xi32>
      %149 = arith.andi %146, %148 : vector<1x256xi1>
      %c1_i32_26 = arith.constant 1 : i32
      %150 = tpu.dynamic_rotate %14 by %c1_i32_26 dim 1 : vector<1x256xf32>, i32 -> vector<1x256xf32>
      %cst_27 = arith.constant 0.000000e+00 : f32
      %151 = vector.broadcast %cst_27 : f32 to vector<1x256xf32>
      %152 = arith.select %149, %150, %151 : vector<1x256xi1>, vector<1x256xf32>
      %c1_i32_28 = arith.constant 1 : i32
      %153 = tpu.dynamic_rotate %15 by %c1_i32_28 dim 1 : vector<1x256xf32>, i32 -> vector<1x256xf32>
      %cst_29 = arith.constant 0.000000e+00 : f32
      %154 = vector.broadcast %cst_29 : f32 to vector<1x256xf32>
      %155 = arith.select %149, %153, %154 : vector<1x256xi1>, vector<1x256xf32>
      %c2 = arith.constant 2 : index
      %156 = memref.load %arg2[%c2] : memref<98xf32, #tpu.memory_space<smem>>
      %c51 = arith.constant 51 : index
      %157 = memref.load %arg2[%c51] : memref<98xf32, #tpu.memory_space<smem>>
      %158 = vector.broadcast %156 : f32 to vector<1x256xf32>
      %159 = arith.mulf %158, %152 : vector<1x256xf32>
      %160 = vector.broadcast %157 : f32 to vector<1x256xf32>
      %161 = arith.mulf %160, %155 : vector<1x256xf32>
      %162 = arith.addf %159, %161 : vector<1x256xf32>
      %163 = arith.addf %96, %162 : vector<1x256xf32>
      %c9 = arith.constant 9 : index
      %164 = memref.load %arg2[%c9] : memref<98xf32, #tpu.memory_space<smem>>
      %c58 = arith.constant 58 : index
      %165 = memref.load %arg2[%c58] : memref<98xf32, #tpu.memory_space<smem>>
      %166 = vector.broadcast %164 : f32 to vector<1x256xf32>
      %167 = arith.mulf %166, %152 : vector<1x256xf32>
      %168 = vector.broadcast %165 : f32 to vector<1x256xf32>
      %169 = arith.mulf %168, %155 : vector<1x256xf32>
      %170 = arith.addf %167, %169 : vector<1x256xf32>
      %171 = arith.addf %104, %170 : vector<1x256xf32>
      %c16 = arith.constant 16 : index
      %172 = memref.load %arg2[%c16] : memref<98xf32, #tpu.memory_space<smem>>
      %c65 = arith.constant 65 : index
      %173 = memref.load %arg2[%c65] : memref<98xf32, #tpu.memory_space<smem>>
      %174 = vector.broadcast %172 : f32 to vector<1x256xf32>
      %175 = arith.mulf %174, %152 : vector<1x256xf32>
      %176 = vector.broadcast %173 : f32 to vector<1x256xf32>
      %177 = arith.mulf %176, %155 : vector<1x256xf32>
      %178 = arith.addf %175, %177 : vector<1x256xf32>
      %179 = arith.addf %112, %178 : vector<1x256xf32>
      %c23 = arith.constant 23 : index
      %180 = memref.load %arg2[%c23] : memref<98xf32, #tpu.memory_space<smem>>
      %c72 = arith.constant 72 : index
      %181 = memref.load %arg2[%c72] : memref<98xf32, #tpu.memory_space<smem>>
      %182 = vector.broadcast %180 : f32 to vector<1x256xf32>
      %183 = arith.mulf %182, %152 : vector<1x256xf32>
      %184 = vector.broadcast %181 : f32 to vector<1x256xf32>
      %185 = arith.mulf %184, %155 : vector<1x256xf32>
      %186 = arith.addf %183, %185 : vector<1x256xf32>
      %187 = arith.addf %120, %186 : vector<1x256xf32>
      %c30 = arith.constant 30 : index
      %188 = memref.load %arg2[%c30] : memref<98xf32, #tpu.memory_space<smem>>
      %c79 = arith.constant 79 : index
      %189 = memref.load %arg2[%c79] : memref<98xf32, #tpu.memory_space<smem>>
      %190 = vector.broadcast %188 : f32 to vector<1x256xf32>
      %191 = arith.mulf %190, %152 : vector<1x256xf32>
      %192 = vector.broadcast %189 : f32 to vector<1x256xf32>
      %193 = arith.mulf %192, %155 : vector<1x256xf32>
      %194 = arith.addf %191, %193 : vector<1x256xf32>
      %195 = arith.addf %128, %194 : vector<1x256xf32>
      %c37 = arith.constant 37 : index
      %196 = memref.load %arg2[%c37] : memref<98xf32, #tpu.memory_space<smem>>
      %c86 = arith.constant 86 : index
      %197 = memref.load %arg2[%c86] : memref<98xf32, #tpu.memory_space<smem>>
      %198 = vector.broadcast %196 : f32 to vector<1x256xf32>
      %199 = arith.mulf %198, %152 : vector<1x256xf32>
      %200 = vector.broadcast %197 : f32 to vector<1x256xf32>
      %201 = arith.mulf %200, %155 : vector<1x256xf32>
      %202 = arith.addf %199, %201 : vector<1x256xf32>
      %203 = arith.addf %136, %202 : vector<1x256xf32>
      %c44 = arith.constant 44 : index
      %204 = memref.load %arg2[%c44] : memref<98xf32, #tpu.memory_space<smem>>
      %c93 = arith.constant 93 : index
      %205 = memref.load %arg2[%c93] : memref<98xf32, #tpu.memory_space<smem>>
      %206 = vector.broadcast %204 : f32 to vector<1x256xf32>
      %207 = arith.mulf %206, %152 : vector<1x256xf32>
      %208 = vector.broadcast %205 : f32 to vector<1x256xf32>
      %209 = arith.mulf %208, %155 : vector<1x256xf32>
      %210 = arith.addf %207, %209 : vector<1x256xf32>
      %211 = arith.addf %144, %210 : vector<1x256xf32>
      %c3 = arith.constant 3 : index
      %212 = memref.load %arg2[%c3] : memref<98xf32, #tpu.memory_space<smem>>
      %c52 = arith.constant 52 : index
      %213 = memref.load %arg2[%c52] : memref<98xf32, #tpu.memory_space<smem>>
      %214 = vector.broadcast %212 : f32 to vector<1x256xf32>
      %215 = arith.mulf %214, %14 : vector<1x256xf32>
      %216 = vector.broadcast %213 : f32 to vector<1x256xf32>
      %217 = arith.mulf %216, %15 : vector<1x256xf32>
      %218 = arith.addf %215, %217 : vector<1x256xf32>
      %219 = arith.addf %163, %218 : vector<1x256xf32>
      %c10 = arith.constant 10 : index
      %220 = memref.load %arg2[%c10] : memref<98xf32, #tpu.memory_space<smem>>
      %c59 = arith.constant 59 : index
      %221 = memref.load %arg2[%c59] : memref<98xf32, #tpu.memory_space<smem>>
      %222 = vector.broadcast %220 : f32 to vector<1x256xf32>
      %223 = arith.mulf %222, %14 : vector<1x256xf32>
      %224 = vector.broadcast %221 : f32 to vector<1x256xf32>
      %225 = arith.mulf %224, %15 : vector<1x256xf32>
      %226 = arith.addf %223, %225 : vector<1x256xf32>
      %227 = arith.addf %171, %226 : vector<1x256xf32>
      %c17 = arith.constant 17 : index
      %228 = memref.load %arg2[%c17] : memref<98xf32, #tpu.memory_space<smem>>
      %c66 = arith.constant 66 : index
      %229 = memref.load %arg2[%c66] : memref<98xf32, #tpu.memory_space<smem>>
      %230 = vector.broadcast %228 : f32 to vector<1x256xf32>
      %231 = arith.mulf %230, %14 : vector<1x256xf32>
      %232 = vector.broadcast %229 : f32 to vector<1x256xf32>
      %233 = arith.mulf %232, %15 : vector<1x256xf32>
      %234 = arith.addf %231, %233 : vector<1x256xf32>
      %235 = arith.addf %179, %234 : vector<1x256xf32>
      %c24 = arith.constant 24 : index
      %236 = memref.load %arg2[%c24] : memref<98xf32, #tpu.memory_space<smem>>
      %c73 = arith.constant 73 : index
      %237 = memref.load %arg2[%c73] : memref<98xf32, #tpu.memory_space<smem>>
      %238 = vector.broadcast %236 : f32 to vector<1x256xf32>
      %239 = arith.mulf %238, %14 : vector<1x256xf32>
      %240 = vector.broadcast %237 : f32 to vector<1x256xf32>
      %241 = arith.mulf %240, %15 : vector<1x256xf32>
      %242 = arith.addf %239, %241 : vector<1x256xf32>
      %243 = arith.addf %187, %242 : vector<1x256xf32>
      %c31 = arith.constant 31 : index
      %244 = memref.load %arg2[%c31] : memref<98xf32, #tpu.memory_space<smem>>
      %c80 = arith.constant 80 : index
      %245 = memref.load %arg2[%c80] : memref<98xf32, #tpu.memory_space<smem>>
      %246 = vector.broadcast %244 : f32 to vector<1x256xf32>
      %247 = arith.mulf %246, %14 : vector<1x256xf32>
      %248 = vector.broadcast %245 : f32 to vector<1x256xf32>
      %249 = arith.mulf %248, %15 : vector<1x256xf32>
      %250 = arith.addf %247, %249 : vector<1x256xf32>
      %251 = arith.addf %195, %250 : vector<1x256xf32>
      %c38 = arith.constant 38 : index
      %252 = memref.load %arg2[%c38] : memref<98xf32, #tpu.memory_space<smem>>
      %c87 = arith.constant 87 : index
      %253 = memref.load %arg2[%c87] : memref<98xf32, #tpu.memory_space<smem>>
      %254 = vector.broadcast %252 : f32 to vector<1x256xf32>
      %255 = arith.mulf %254, %14 : vector<1x256xf32>
      %256 = vector.broadcast %253 : f32 to vector<1x256xf32>
      %257 = arith.mulf %256, %15 : vector<1x256xf32>
      %258 = arith.addf %255, %257 : vector<1x256xf32>
      %259 = arith.addf %203, %258 : vector<1x256xf32>
      %c45 = arith.constant 45 : index
      %260 = memref.load %arg2[%c45] : memref<98xf32, #tpu.memory_space<smem>>
      %c94 = arith.constant 94 : index
      %261 = memref.load %arg2[%c94] : memref<98xf32, #tpu.memory_space<smem>>
      %262 = vector.broadcast %260 : f32 to vector<1x256xf32>
      %263 = arith.mulf %262, %14 : vector<1x256xf32>
      %264 = vector.broadcast %261 : f32 to vector<1x256xf32>
      %265 = arith.mulf %264, %15 : vector<1x256xf32>
      %266 = arith.addf %263, %265 : vector<1x256xf32>
      %267 = arith.addf %211, %266 : vector<1x256xf32>
      %c-1_i32 = arith.constant -1 : i32
      %268 = vector.broadcast %c-1_i32 : i32 to vector<1x256xi32>
      %269 = arith.cmpi sge, %16, %268 : vector<1x256xi32>
      %c15_i32 = arith.constant 15 : i32
      %270 = vector.broadcast %c15_i32 : i32 to vector<1x256xi32>
      %271 = arith.cmpi slt, %16, %270 : vector<1x256xi32>
      %272 = arith.andi %269, %271 : vector<1x256xi1>
      %c255_i32 = arith.constant 255 : i32
      %273 = tpu.dynamic_rotate %14 by %c255_i32 dim 1 : vector<1x256xf32>, i32 -> vector<1x256xf32>
      %cst_30 = arith.constant 0.000000e+00 : f32
      %274 = vector.broadcast %cst_30 : f32 to vector<1x256xf32>
      %275 = arith.select %272, %273, %274 : vector<1x256xi1>, vector<1x256xf32>
      %c255_i32_31 = arith.constant 255 : i32
      %276 = tpu.dynamic_rotate %15 by %c255_i32_31 dim 1 : vector<1x256xf32>, i32 -> vector<1x256xf32>
      %cst_32 = arith.constant 0.000000e+00 : f32
      %277 = vector.broadcast %cst_32 : f32 to vector<1x256xf32>
      %278 = arith.select %272, %276, %277 : vector<1x256xi1>, vector<1x256xf32>
      %c4 = arith.constant 4 : index
      %279 = memref.load %arg2[%c4] : memref<98xf32, #tpu.memory_space<smem>>
      %c53 = arith.constant 53 : index
      %280 = memref.load %arg2[%c53] : memref<98xf32, #tpu.memory_space<smem>>
      %281 = vector.broadcast %279 : f32 to vector<1x256xf32>
      %282 = arith.mulf %281, %275 : vector<1x256xf32>
      %283 = vector.broadcast %280 : f32 to vector<1x256xf32>
      %284 = arith.mulf %283, %278 : vector<1x256xf32>
      %285 = arith.addf %282, %284 : vector<1x256xf32>
      %286 = arith.addf %219, %285 : vector<1x256xf32>
      %c11 = arith.constant 11 : index
      %287 = memref.load %arg2[%c11] : memref<98xf32, #tpu.memory_space<smem>>
      %c60 = arith.constant 60 : index
      %288 = memref.load %arg2[%c60] : memref<98xf32, #tpu.memory_space<smem>>
      %289 = vector.broadcast %287 : f32 to vector<1x256xf32>
      %290 = arith.mulf %289, %275 : vector<1x256xf32>
      %291 = vector.broadcast %288 : f32 to vector<1x256xf32>
      %292 = arith.mulf %291, %278 : vector<1x256xf32>
      %293 = arith.addf %290, %292 : vector<1x256xf32>
      %294 = arith.addf %227, %293 : vector<1x256xf32>
      %c18 = arith.constant 18 : index
      %295 = memref.load %arg2[%c18] : memref<98xf32, #tpu.memory_space<smem>>
      %c67 = arith.constant 67 : index
      %296 = memref.load %arg2[%c67] : memref<98xf32, #tpu.memory_space<smem>>
      %297 = vector.broadcast %295 : f32 to vector<1x256xf32>
      %298 = arith.mulf %297, %275 : vector<1x256xf32>
      %299 = vector.broadcast %296 : f32 to vector<1x256xf32>
      %300 = arith.mulf %299, %278 : vector<1x256xf32>
      %301 = arith.addf %298, %300 : vector<1x256xf32>
      %302 = arith.addf %235, %301 : vector<1x256xf32>
      %c25 = arith.constant 25 : index
      %303 = memref.load %arg2[%c25] : memref<98xf32, #tpu.memory_space<smem>>
      %c74 = arith.constant 74 : index
      %304 = memref.load %arg2[%c74] : memref<98xf32, #tpu.memory_space<smem>>
      %305 = vector.broadcast %303 : f32 to vector<1x256xf32>
      %306 = arith.mulf %305, %275 : vector<1x256xf32>
      %307 = vector.broadcast %304 : f32 to vector<1x256xf32>
      %308 = arith.mulf %307, %278 : vector<1x256xf32>
      %309 = arith.addf %306, %308 : vector<1x256xf32>
      %310 = arith.addf %243, %309 : vector<1x256xf32>
      %c32 = arith.constant 32 : index
      %311 = memref.load %arg2[%c32] : memref<98xf32, #tpu.memory_space<smem>>
      %c81 = arith.constant 81 : index
      %312 = memref.load %arg2[%c81] : memref<98xf32, #tpu.memory_space<smem>>
      %313 = vector.broadcast %311 : f32 to vector<1x256xf32>
      %314 = arith.mulf %313, %275 : vector<1x256xf32>
      %315 = vector.broadcast %312 : f32 to vector<1x256xf32>
      %316 = arith.mulf %315, %278 : vector<1x256xf32>
      %317 = arith.addf %314, %316 : vector<1x256xf32>
      %318 = arith.addf %251, %317 : vector<1x256xf32>
      %c39 = arith.constant 39 : index
      %319 = memref.load %arg2[%c39] : memref<98xf32, #tpu.memory_space<smem>>
      %c88 = arith.constant 88 : index
      %320 = memref.load %arg2[%c88] : memref<98xf32, #tpu.memory_space<smem>>
      %321 = vector.broadcast %319 : f32 to vector<1x256xf32>
      %322 = arith.mulf %321, %275 : vector<1x256xf32>
      %323 = vector.broadcast %320 : f32 to vector<1x256xf32>
      %324 = arith.mulf %323, %278 : vector<1x256xf32>
      %325 = arith.addf %322, %324 : vector<1x256xf32>
      %326 = arith.addf %259, %325 : vector<1x256xf32>
      %c46 = arith.constant 46 : index
      %327 = memref.load %arg2[%c46] : memref<98xf32, #tpu.memory_space<smem>>
      %c95 = arith.constant 95 : index
      %328 = memref.load %arg2[%c95] : memref<98xf32, #tpu.memory_space<smem>>
      %329 = vector.broadcast %327 : f32 to vector<1x256xf32>
      %330 = arith.mulf %329, %275 : vector<1x256xf32>
      %331 = vector.broadcast %328 : f32 to vector<1x256xf32>
      %332 = arith.mulf %331, %278 : vector<1x256xf32>
      %333 = arith.addf %330, %332 : vector<1x256xf32>
      %334 = arith.addf %267, %333 : vector<1x256xf32>
      %c-2_i32 = arith.constant -2 : i32
      %335 = vector.broadcast %c-2_i32 : i32 to vector<1x256xi32>
      %336 = arith.cmpi sge, %16, %335 : vector<1x256xi32>
      %c14_i32 = arith.constant 14 : i32
      %337 = vector.broadcast %c14_i32 : i32 to vector<1x256xi32>
      %338 = arith.cmpi slt, %16, %337 : vector<1x256xi32>
      %339 = arith.andi %336, %338 : vector<1x256xi1>
      %c254_i32 = arith.constant 254 : i32
      %340 = tpu.dynamic_rotate %14 by %c254_i32 dim 1 : vector<1x256xf32>, i32 -> vector<1x256xf32>
      %cst_33 = arith.constant 0.000000e+00 : f32
      %341 = vector.broadcast %cst_33 : f32 to vector<1x256xf32>
      %342 = arith.select %339, %340, %341 : vector<1x256xi1>, vector<1x256xf32>
      %c254_i32_34 = arith.constant 254 : i32
      %343 = tpu.dynamic_rotate %15 by %c254_i32_34 dim 1 : vector<1x256xf32>, i32 -> vector<1x256xf32>
      %cst_35 = arith.constant 0.000000e+00 : f32
      %344 = vector.broadcast %cst_35 : f32 to vector<1x256xf32>
      %345 = arith.select %339, %343, %344 : vector<1x256xi1>, vector<1x256xf32>
      %c5 = arith.constant 5 : index
      %346 = memref.load %arg2[%c5] : memref<98xf32, #tpu.memory_space<smem>>
      %c54 = arith.constant 54 : index
      %347 = memref.load %arg2[%c54] : memref<98xf32, #tpu.memory_space<smem>>
      %348 = vector.broadcast %346 : f32 to vector<1x256xf32>
      %349 = arith.mulf %348, %342 : vector<1x256xf32>
      %350 = vector.broadcast %347 : f32 to vector<1x256xf32>
      %351 = arith.mulf %350, %345 : vector<1x256xf32>
      %352 = arith.addf %349, %351 : vector<1x256xf32>
      %353 = arith.addf %286, %352 : vector<1x256xf32>
      %c12 = arith.constant 12 : index
      %354 = memref.load %arg2[%c12] : memref<98xf32, #tpu.memory_space<smem>>
      %c61 = arith.constant 61 : index
      %355 = memref.load %arg2[%c61] : memref<98xf32, #tpu.memory_space<smem>>
      %356 = vector.broadcast %354 : f32 to vector<1x256xf32>
      %357 = arith.mulf %356, %342 : vector<1x256xf32>
      %358 = vector.broadcast %355 : f32 to vector<1x256xf32>
      %359 = arith.mulf %358, %345 : vector<1x256xf32>
      %360 = arith.addf %357, %359 : vector<1x256xf32>
      %361 = arith.addf %294, %360 : vector<1x256xf32>
      %c19 = arith.constant 19 : index
      %362 = memref.load %arg2[%c19] : memref<98xf32, #tpu.memory_space<smem>>
      %c68 = arith.constant 68 : index
      %363 = memref.load %arg2[%c68] : memref<98xf32, #tpu.memory_space<smem>>
      %364 = vector.broadcast %362 : f32 to vector<1x256xf32>
      %365 = arith.mulf %364, %342 : vector<1x256xf32>
      %366 = vector.broadcast %363 : f32 to vector<1x256xf32>
      %367 = arith.mulf %366, %345 : vector<1x256xf32>
      %368 = arith.addf %365, %367 : vector<1x256xf32>
      %369 = arith.addf %302, %368 : vector<1x256xf32>
      %c26 = arith.constant 26 : index
      %370 = memref.load %arg2[%c26] : memref<98xf32, #tpu.memory_space<smem>>
      %c75 = arith.constant 75 : index
      %371 = memref.load %arg2[%c75] : memref<98xf32, #tpu.memory_space<smem>>
      %372 = vector.broadcast %370 : f32 to vector<1x256xf32>
      %373 = arith.mulf %372, %342 : vector<1x256xf32>
      %374 = vector.broadcast %371 : f32 to vector<1x256xf32>
      %375 = arith.mulf %374, %345 : vector<1x256xf32>
      %376 = arith.addf %373, %375 : vector<1x256xf32>
      %377 = arith.addf %310, %376 : vector<1x256xf32>
      %c33 = arith.constant 33 : index
      %378 = memref.load %arg2[%c33] : memref<98xf32, #tpu.memory_space<smem>>
      %c82 = arith.constant 82 : index
      %379 = memref.load %arg2[%c82] : memref<98xf32, #tpu.memory_space<smem>>
      %380 = vector.broadcast %378 : f32 to vector<1x256xf32>
      %381 = arith.mulf %380, %342 : vector<1x256xf32>
      %382 = vector.broadcast %379 : f32 to vector<1x256xf32>
      %383 = arith.mulf %382, %345 : vector<1x256xf32>
      %384 = arith.addf %381, %383 : vector<1x256xf32>
      %385 = arith.addf %318, %384 : vector<1x256xf32>
      %c40 = arith.constant 40 : index
      %386 = memref.load %arg2[%c40] : memref<98xf32, #tpu.memory_space<smem>>
      %c89 = arith.constant 89 : index
      %387 = memref.load %arg2[%c89] : memref<98xf32, #tpu.memory_space<smem>>
      %388 = vector.broadcast %386 : f32 to vector<1x256xf32>
      %389 = arith.mulf %388, %342 : vector<1x256xf32>
      %390 = vector.broadcast %387 : f32 to vector<1x256xf32>
      %391 = arith.mulf %390, %345 : vector<1x256xf32>
      %392 = arith.addf %389, %391 : vector<1x256xf32>
      %393 = arith.addf %326, %392 : vector<1x256xf32>
      %c47 = arith.constant 47 : index
      %394 = memref.load %arg2[%c47] : memref<98xf32, #tpu.memory_space<smem>>
      %c96 = arith.constant 96 : index
      %395 = memref.load %arg2[%c96] : memref<98xf32, #tpu.memory_space<smem>>
      %396 = vector.broadcast %394 : f32 to vector<1x256xf32>
      %397 = arith.mulf %396, %342 : vector<1x256xf32>
      %398 = vector.broadcast %395 : f32 to vector<1x256xf32>
      %399 = arith.mulf %398, %345 : vector<1x256xf32>
      %400 = arith.addf %397, %399 : vector<1x256xf32>
      %401 = arith.addf %334, %400 : vector<1x256xf32>
      %c-3_i32 = arith.constant -3 : i32
      %402 = vector.broadcast %c-3_i32 : i32 to vector<1x256xi32>
      %403 = arith.cmpi sge, %16, %402 : vector<1x256xi32>
      %c13_i32 = arith.constant 13 : i32
      %404 = vector.broadcast %c13_i32 : i32 to vector<1x256xi32>
      %405 = arith.cmpi slt, %16, %404 : vector<1x256xi32>
      %406 = arith.andi %403, %405 : vector<1x256xi1>
      %c253_i32 = arith.constant 253 : i32
      %407 = tpu.dynamic_rotate %14 by %c253_i32 dim 1 : vector<1x256xf32>, i32 -> vector<1x256xf32>
      %cst_36 = arith.constant 0.000000e+00 : f32
      %408 = vector.broadcast %cst_36 : f32 to vector<1x256xf32>
      %409 = arith.select %406, %407, %408 : vector<1x256xi1>, vector<1x256xf32>
      %c253_i32_37 = arith.constant 253 : i32
      %410 = tpu.dynamic_rotate %15 by %c253_i32_37 dim 1 : vector<1x256xf32>, i32 -> vector<1x256xf32>
      %cst_38 = arith.constant 0.000000e+00 : f32
      %411 = vector.broadcast %cst_38 : f32 to vector<1x256xf32>
      %412 = arith.select %406, %410, %411 : vector<1x256xi1>, vector<1x256xf32>
      %c6 = arith.constant 6 : index
      %413 = memref.load %arg2[%c6] : memref<98xf32, #tpu.memory_space<smem>>
      %c55 = arith.constant 55 : index
      %414 = memref.load %arg2[%c55] : memref<98xf32, #tpu.memory_space<smem>>
      %415 = vector.broadcast %413 : f32 to vector<1x256xf32>
      %416 = arith.mulf %415, %409 : vector<1x256xf32>
      %417 = vector.broadcast %414 : f32 to vector<1x256xf32>
      %418 = arith.mulf %417, %412 : vector<1x256xf32>
      %419 = arith.addf %416, %418 : vector<1x256xf32>
      %420 = arith.addf %353, %419 : vector<1x256xf32>
      %c13 = arith.constant 13 : index
      %421 = memref.load %arg2[%c13] : memref<98xf32, #tpu.memory_space<smem>>
      %c62 = arith.constant 62 : index
      %422 = memref.load %arg2[%c62] : memref<98xf32, #tpu.memory_space<smem>>
      %423 = vector.broadcast %421 : f32 to vector<1x256xf32>
      %424 = arith.mulf %423, %409 : vector<1x256xf32>
      %425 = vector.broadcast %422 : f32 to vector<1x256xf32>
      %426 = arith.mulf %425, %412 : vector<1x256xf32>
      %427 = arith.addf %424, %426 : vector<1x256xf32>
      %428 = arith.addf %361, %427 : vector<1x256xf32>
      %c20 = arith.constant 20 : index
      %429 = memref.load %arg2[%c20] : memref<98xf32, #tpu.memory_space<smem>>
      %c69 = arith.constant 69 : index
      %430 = memref.load %arg2[%c69] : memref<98xf32, #tpu.memory_space<smem>>
      %431 = vector.broadcast %429 : f32 to vector<1x256xf32>
      %432 = arith.mulf %431, %409 : vector<1x256xf32>
      %433 = vector.broadcast %430 : f32 to vector<1x256xf32>
      %434 = arith.mulf %433, %412 : vector<1x256xf32>
      %435 = arith.addf %432, %434 : vector<1x256xf32>
      %436 = arith.addf %369, %435 : vector<1x256xf32>
      %c27 = arith.constant 27 : index
      %437 = memref.load %arg2[%c27] : memref<98xf32, #tpu.memory_space<smem>>
      %c76 = arith.constant 76 : index
      %438 = memref.load %arg2[%c76] : memref<98xf32, #tpu.memory_space<smem>>
      %439 = vector.broadcast %437 : f32 to vector<1x256xf32>
      %440 = arith.mulf %439, %409 : vector<1x256xf32>
      %441 = vector.broadcast %438 : f32 to vector<1x256xf32>
      %442 = arith.mulf %441, %412 : vector<1x256xf32>
      %443 = arith.addf %440, %442 : vector<1x256xf32>
      %444 = arith.addf %377, %443 : vector<1x256xf32>
      %c34 = arith.constant 34 : index
      %445 = memref.load %arg2[%c34] : memref<98xf32, #tpu.memory_space<smem>>
      %c83 = arith.constant 83 : index
      %446 = memref.load %arg2[%c83] : memref<98xf32, #tpu.memory_space<smem>>
      %447 = vector.broadcast %445 : f32 to vector<1x256xf32>
      %448 = arith.mulf %447, %409 : vector<1x256xf32>
      %449 = vector.broadcast %446 : f32 to vector<1x256xf32>
      %450 = arith.mulf %449, %412 : vector<1x256xf32>
      %451 = arith.addf %448, %450 : vector<1x256xf32>
      %452 = arith.addf %385, %451 : vector<1x256xf32>
      %c41 = arith.constant 41 : index
      %453 = memref.load %arg2[%c41] : memref<98xf32, #tpu.memory_space<smem>>
      %c90 = arith.constant 90 : index
      %454 = memref.load %arg2[%c90] : memref<98xf32, #tpu.memory_space<smem>>
      %455 = vector.broadcast %453 : f32 to vector<1x256xf32>
      %456 = arith.mulf %455, %409 : vector<1x256xf32>
      %457 = vector.broadcast %454 : f32 to vector<1x256xf32>
      %458 = arith.mulf %457, %412 : vector<1x256xf32>
      %459 = arith.addf %456, %458 : vector<1x256xf32>
      %460 = arith.addf %393, %459 : vector<1x256xf32>
      %c48 = arith.constant 48 : index
      %461 = memref.load %arg2[%c48] : memref<98xf32, #tpu.memory_space<smem>>
      %c97 = arith.constant 97 : index
      %462 = memref.load %arg2[%c97] : memref<98xf32, #tpu.memory_space<smem>>
      %463 = vector.broadcast %461 : f32 to vector<1x256xf32>
      %464 = arith.mulf %463, %409 : vector<1x256xf32>
      %465 = vector.broadcast %462 : f32 to vector<1x256xf32>
      %466 = arith.mulf %465, %412 : vector<1x256xf32>
      %467 = arith.addf %464, %466 : vector<1x256xf32>
      %468 = arith.addf %401, %467 : vector<1x256xf32>
      %c3_i32_39 = arith.constant 3 : i32
      %469 = vector.broadcast %c3_i32_39 : i32 to vector<1x256xi32>
      %470 = arith.cmpi sge, %17, %469 : vector<1x256xi32>
      %c19_i32_40 = arith.constant 19 : i32
      %471 = vector.broadcast %c19_i32_40 : i32 to vector<1x256xi32>
      %472 = arith.cmpi slt, %17, %471 : vector<1x256xi32>
      %473 = arith.andi %470, %472 : vector<1x256xi1>
      %c48_i32 = arith.constant 48 : i32
      %474 = tpu.dynamic_rotate %420 by %c48_i32 dim 1 : vector<1x256xf32>, i32 -> vector<1x256xf32>
      %cst_41 = arith.constant 0.000000e+00 : f32
      %475 = vector.broadcast %cst_41 : f32 to vector<1x256xf32>
      %476 = arith.select %473, %474, %475 : vector<1x256xi1>, vector<1x256xf32>
      %c2_i32_42 = arith.constant 2 : i32
      %477 = vector.broadcast %c2_i32_42 : i32 to vector<1x256xi32>
      %478 = arith.cmpi sge, %17, %477 : vector<1x256xi32>
      %c18_i32_43 = arith.constant 18 : i32
      %479 = vector.broadcast %c18_i32_43 : i32 to vector<1x256xi32>
      %480 = arith.cmpi slt, %17, %479 : vector<1x256xi32>
      %481 = arith.andi %478, %480 : vector<1x256xi1>
      %c32_i32 = arith.constant 32 : i32
      %482 = tpu.dynamic_rotate %428 by %c32_i32 dim 1 : vector<1x256xf32>, i32 -> vector<1x256xf32>
      %cst_44 = arith.constant 0.000000e+00 : f32
      %483 = vector.broadcast %cst_44 : f32 to vector<1x256xf32>
      %484 = arith.select %481, %482, %483 : vector<1x256xi1>, vector<1x256xf32>
      %485 = arith.addf %476, %484 : vector<1x256xf32>
      %c1_i32_45 = arith.constant 1 : i32
      %486 = vector.broadcast %c1_i32_45 : i32 to vector<1x256xi32>
      %487 = arith.cmpi sge, %17, %486 : vector<1x256xi32>
      %c17_i32_46 = arith.constant 17 : i32
      %488 = vector.broadcast %c17_i32_46 : i32 to vector<1x256xi32>
      %489 = arith.cmpi slt, %17, %488 : vector<1x256xi32>
      %490 = arith.andi %487, %489 : vector<1x256xi1>
      %c16_i32 = arith.constant 16 : i32
      %491 = tpu.dynamic_rotate %436 by %c16_i32 dim 1 : vector<1x256xf32>, i32 -> vector<1x256xf32>
      %cst_47 = arith.constant 0.000000e+00 : f32
      %492 = vector.broadcast %cst_47 : f32 to vector<1x256xf32>
      %493 = arith.select %490, %491, %492 : vector<1x256xi1>, vector<1x256xf32>
      %494 = arith.addf %485, %493 : vector<1x256xf32>
      %495 = arith.addf %494, %444 : vector<1x256xf32>
      %c-1_i32_48 = arith.constant -1 : i32
      %496 = vector.broadcast %c-1_i32_48 : i32 to vector<1x256xi32>
      %497 = arith.cmpi sge, %17, %496 : vector<1x256xi32>
      %c15_i32_49 = arith.constant 15 : i32
      %498 = vector.broadcast %c15_i32_49 : i32 to vector<1x256xi32>
      %499 = arith.cmpi slt, %17, %498 : vector<1x256xi32>
      %500 = arith.andi %497, %499 : vector<1x256xi1>
      %c240_i32 = arith.constant 240 : i32
      %501 = tpu.dynamic_rotate %452 by %c240_i32 dim 1 : vector<1x256xf32>, i32 -> vector<1x256xf32>
      %cst_50 = arith.constant 0.000000e+00 : f32
      %502 = vector.broadcast %cst_50 : f32 to vector<1x256xf32>
      %503 = arith.select %500, %501, %502 : vector<1x256xi1>, vector<1x256xf32>
      %504 = arith.addf %495, %503 : vector<1x256xf32>
      %c-2_i32_51 = arith.constant -2 : i32
      %505 = vector.broadcast %c-2_i32_51 : i32 to vector<1x256xi32>
      %506 = arith.cmpi sge, %17, %505 : vector<1x256xi32>
      %c14_i32_52 = arith.constant 14 : i32
      %507 = vector.broadcast %c14_i32_52 : i32 to vector<1x256xi32>
      %508 = arith.cmpi slt, %17, %507 : vector<1x256xi32>
      %509 = arith.andi %506, %508 : vector<1x256xi1>
      %c224_i32 = arith.constant 224 : i32
      %510 = tpu.dynamic_rotate %460 by %c224_i32 dim 1 : vector<1x256xf32>, i32 -> vector<1x256xf32>
      %cst_53 = arith.constant 0.000000e+00 : f32
      %511 = vector.broadcast %cst_53 : f32 to vector<1x256xf32>
      %512 = arith.select %509, %510, %511 : vector<1x256xi1>, vector<1x256xf32>
      %513 = arith.addf %504, %512 : vector<1x256xf32>
      %c-3_i32_54 = arith.constant -3 : i32
      %514 = vector.broadcast %c-3_i32_54 : i32 to vector<1x256xi32>
      %515 = arith.cmpi sge, %17, %514 : vector<1x256xi32>
      %c13_i32_55 = arith.constant 13 : i32
      %516 = vector.broadcast %c13_i32_55 : i32 to vector<1x256xi32>
      %517 = arith.cmpi slt, %17, %516 : vector<1x256xi32>
      %518 = arith.andi %515, %517 : vector<1x256xi1>
      %c208_i32 = arith.constant 208 : i32
      %519 = tpu.dynamic_rotate %468 by %c208_i32 dim 1 : vector<1x256xf32>, i32 -> vector<1x256xf32>
      %cst_56 = arith.constant 0.000000e+00 : f32
      %520 = vector.broadcast %cst_56 : f32 to vector<1x256xf32>
      %521 = arith.select %518, %519, %520 : vector<1x256xi1>, vector<1x256xf32>
      %522 = arith.addf %513, %521 : vector<1x256xf32>
      %523 = arith.negf %522 : vector<1x256xf32>
      %524 = math.exp %523 : vector<1x256xf32>
      %cst_57 = arith.constant 1.000000e+00 : f32
      %525 = vector.broadcast %cst_57 : f32 to vector<1x256xf32>
      %526 = arith.addf %525, %524 : vector<1x256xf32>
      %527 = arith.divf %525, %526 : vector<1x256xf32>
      %c0_58 = arith.constant 0 : index
      %c0_59 = arith.constant 0 : index
      %c0_60 = arith.constant 0 : index
      %528 = vector.load %arg6[%c0_58, %c0_59, %c0_60] : memref<1x1x256xf32, #tpu.memory_space<vmem>>, vector<1x1x256xf32>
      %529 = vector.shape_cast %528 : vector<1x1x256xf32> to vector<1x256xf32>
      %530 = vector.shape_cast %527 : vector<1x256xf32> to vector<1x1x256xf32>
      tpu.vector_store %arg6[%c0_58, %c0_59, %c0_60], %530 {strides = array<i32>} : memref<1x1x256xf32, #tpu.memory_space<vmem>>, vector<1x1x256xf32>,
    } else {
    }
    return
  }
  func.func @transform_0(%arg0: i32, %arg1: i32, %arg2: memref<98xf32, #tpu.memory_space<smem>>) -> (i32, i32, i32) {
    %c0_i32 = arith.constant 0 : i32
    %c0_i32_0 = arith.constant 0 : i32
    return %arg0, %arg1, %c0_i32 : i32, i32, i32
  }
  func.func @transform_1(%arg0: i32, %arg1: i32, %arg2: memref<98xf32, #tpu.memory_space<smem>>) -> (i32, i32) {
    %c0_i32 = arith.constant 0 : i32
    %c0_i32_0 = arith.constant 0 : i32
    %c0_i32_1 = arith.constant 0 : i32
    return %c0_i32, %c0_i32_0 : i32, i32
  }
  func.func @transform_2(%arg0: i32, %arg1: i32, %arg2: memref<98xf32, #tpu.memory_space<smem>>) -> (i32, i32) {
    %c0_i32 = arith.constant 0 : i32
    %c0_i32_0 = arith.constant 0 : i32
    %c0_i32_1 = arith.constant 0 : i32
    return %c0_i32, %c0_i32_0 : i32, i32
  }
  func.func @transform_3(%arg0: i32, %arg1: i32, %arg2: memref<98xf32, #tpu.memory_space<smem>>) -> (i32, i32, i32) {
    %c0_i32 = arith.constant 0 : i32
    %c0_i32_0 = arith.constant 0 : i32
    %c0_i32_1 = arith.constant 0 : i32
    return %arg0, %c0_i32, %c0_i32_0 : i32, i32, i32
  }
}

</mosaic_0001>

<llo_original>
// kernel: tpu_custom_call.1
$region0: #{tpu_custom_call.1}
  #allocation0 [shape = 'u32[]', space=smem, size = 0x4, offset = 0x4, fixed_abs, tag = 'smem constant byte address 0x4 - core index']
  #allocation1 [shape = 'u32[144,128]{1,0:T(1,128)}', space=vmem, size = 0x12000, scoped, tag = 'internal scratch']
  #allocation2 [shape = 'f32[1,256]{1,0:T(1,128)}', space=vmem, size = 0x400, scoped, tag = 'scratch operand']
  #allocation3 [shape = 'f32[1,256]{1,0:T(1,128)}', space=vmem, size = 0x400, scoped, tag = 'scratch operand']
  #allocation4 [shape = 's32[1]{0}', space=sflag, size = 0x4, scoped, tag = 'scoped memory for tpu_custom_call.1']
  #allocation5 [shape = 'u8[512]{0}', space=smem, size = 0x200, scoped, tag = 'prefetched SMEM operand 0']
  %s0 = inlined_call_operand.hbm [shape: f32[98], index: 0, kind: input, shape index: {}]
  %s1 = inlined_call_operand.hbm [shape: f32[2,4,256], index: 1, kind: input, shape index: {}]
  %s2 = inlined_call_operand.vmem [shape: s32[1,256], index: 2, kind: input, shape index: {}]
  %s3 = inlined_call_operand.vmem [shape: s32[1,256], index: 3, kind: input, shape index: {}]
  %s4 = inlined_call_operand.hbm [shape: f32[2,1,256], index: 4, kind: output, shape index: {}]
  %s5 = sld [smem:[#allocation0]]
  $region61: #{tpu_custom_call.1} parent=0
    _
  %s7 = ssub.s32 1, %s5
  %s8 = scalar_select 0, %s7, %s5
  %10 = dma.hbm_to_smem %s0, 16, [#allocation5], [#allocation4]
  %11 = dma.done [#allocation4], 16
  %12 = sfence
  $region1: #{tpu_custom_call.1} parent=0
    #allocation6 [shape = 'u8[8192]{0}', space=vmem, size = 0x2000, scoped, tag = 'input window, operand 1']
    #allocation7 [shape = 's32[2]{0}', space=sflag, size = 0x8, scoped, tag = 'scoped memory for tpu_custom_call.1']
    #allocation8 [shape = 's32[2]{0}', space=sflag, size = 0x8, scoped, tag = 'scoped memory for tpu_custom_call.1']
    #allocation9 [shape = 'u8[2048]{0}', space=vmem, size = 0x800, scoped, tag = 'output window, operand 0']
    %13 = vsyncpa [#allocation7], 0
    %s14 = scalar_lea.sflag [#allocation7], 1
    %15 = vsyncpa %s14, 0
    %16 = vsyncpa [#allocation8], 0
    %s17 = scalar_lea.sflag [#allocation8], 1
    %18 = vsyncpa %s17, 0
    loop: start=0, step=1, limit=4
    $region2: #{tpu_custom_call.1} parent=1 // loop_pre_header
      _
    $region3: #{tpu_custom_call.1} parent=1 // loop_header
      %s20 = sphi 0, %s24
      %p21 = scmp.ge.s32.totalorder %s20, 4
      %s27 = sphi 0, %s39
      %s28 = sphi 0, %s35
      %s29 = sphi 0, %s27
      %s30 = sphi 0, %s28
      %s31 = sphi 0, %s29
      %s32 = sphi 0, %s30
      %s44 = sphi 0, %s46
      %s47 = sphi 0, %s44
      %s48 = sphi 0, %s47
      %s64 = sphi 0, %s48
      %s68 = sphi 0, %s68
      %s70 = sphi 0, %s68
      %s71 = sphi 0, %s70
      %s85 = sphi 0, %s71
      %s89 = sphi 0, %s89
      %s91 = sphi 0, %s89
      %s92 = sphi 0, %s91
      %s106 = sphi 0, %s92
      %s112 = sphi 0, %s114
      %s115 = sphi 0, %s112
      %s116 = sphi 0, %s115
      %s132 = sphi 0, %s116
    $region4: #{tpu_custom_call.1} parent=1 // loop_header_branch
      %23 = sbr.rel (%p21) target = $region8
    $region5: #{tpu_custom_call.1} parent=1 // loop_body
      %s25 = ssub.s32 %s20, 1
      %s26 = ssub.s32 %s20, 2
      %s33 = sadd.s32 1, %s28
      %p34 = scmp.ge.s32.totalorder %s33, 1
      %s35 = scalar_select %p34, 0, %s33
      %s36 = sadd.s32 1, %s27
      %s37 = scalar_select %p34, %s36, %s27
      %p38 = scmp.ge.s32.totalorder %s37, 2
      %s39 = scalar_select %p38, 0, %s37
      %s40 = ssub.s32 %s27, %s39
      %s41 = ssub.s32 %s28, %s35
      %s42 = sor.u32 %s40, %s41
      %p43 = scmp.eq.s32.totalorder %s42, 0
      %s45 = sadd.s32 %s44, 1
      %s46 = scalar_select %p43, %s44, %s45
      %p49 = pneg %p43
      %p50 = scmp.eq.s32.totalorder %s20, 1
      %p51 = por %p49, %p50
      %p52 = scmp.ne.s32.totalorder %s44, %s47
      %p53 = scmp.eq.s32.totalorder %s20, 0
      %p54 = por %p52, %p53
      %p55 = scmp.ne.s32.totalorder %s44, %s47
      %p56 = scmp.eq.s32.totalorder %s25, 1
      %p57 = por %p55, %p56
      %p58 = scmp.ne.s32.totalorder %s47, %s48
      %p59 = scmp.eq.s32.totalorder %s25, 0
      %p60 = por %p58, %p59
      %p61 = scmp.ne.s32.totalorder %s47, %s48
      %p62 = scmp.eq.s32.totalorder %s26, 1
      %p63 = por %p61, %p62
      %p65 = scmp.ne.s32.totalorder %s48, %s64
      %p66 = scmp.eq.s32.totalorder %s26, 0
      %p67 = por %p65, %p66
      %s69 = sadd.s32 %s68, 1
      %p72 = scmp.eq.s32.totalorder %s20, 1
      %p73 = scmp.ne.s32.totalorder %s68, %s70
      %p74 = scmp.eq.s32.totalorder %s20, 0
      %p75 = por %p73, %p74
      %p76 = scmp.ne.s32.totalorder %s68, %s70
      %p77 = scmp.eq.s32.totalorder %s25, 1
      %p78 = por %p76, %p77
      %p79 = scmp.ne.s32.totalorder %s70, %s71
      %p80 = scmp.eq.s32.totalorder %s25, 0
      %p81 = por %p79, %p80
      %p82 = scmp.ne.s32.totalorder %s70, %s71
      %p83 = scmp.eq.s32.totalorder %s26, 1
      %p84 = por %p82, %p83
      %p86 = scmp.ne.s32.totalorder %s71, %s85
      %p87 = scmp.eq.s32.totalorder %s26, 0
      %p88 = por %p86, %p87
      %s90 = sadd.s32 %s89, 1
      %p93 = scmp.eq.s32.totalorder %s20, 1
      %p94 = scmp.ne.s32.totalorder %s89, %s91
      %p95 = scmp.eq.s32.totalorder %s20, 0
      %p96 = por %p94, %p95
      %p97 = scmp.ne.s32.totalorder %s89, %s91
      %p98 = scmp.eq.s32.totalorder %s25, 1
      %p99 = por %p97, %p98
      %p100 = scmp.ne.s32.totalorder %s91, %s92
      %p101 = scmp.eq.s32.totalorder %s25, 0
      %p102 = por %p100, %p101
      %p103 = scmp.ne.s32.totalorder %s91, %s92
      %p104 = scmp.eq.s32.totalorder %s26, 1
      %p105 = por %p103, %p104
      %p107 = scmp.ne.s32.totalorder %s92, %s106
      %p108 = scmp.eq.s32.totalorder %s26, 0
      %p109 = por %p107, %p108
      %s110 = ssub.s32 %s27, %s39
      %p111 = scmp.eq.s32.totalorder %s110, 0
      %s113 = sadd.s32 %s112, 1
      %s114 = scalar_select %p111, %s112, %s113
      %p117 = pneg %p111
      %p118 = scmp.eq.s32.totalorder %s20, 1
      %p119 = por %p117, %p118
      %p120 = scmp.ne.s32.totalorder %s112, %s115
      %p121 = scmp.eq.s32.totalorder %s20, 0
      %p122 = por %p120, %p121
      %p123 = scmp.ne.s32.totalorder %s112, %s115
      %p124 = scmp.eq.s32.totalorder %s25, 1
      %p125 = por %p123, %p124
      %p126 = scmp.ne.s32.totalorder %s115, %s116
      %p127 = scmp.eq.s32.totalorder %s25, 0
      %p128 = por %p126, %p127
      %p129 = scmp.ne.s32.totalorder %s115, %s116
      %p130 = scmp.eq.s32.totalorder %s26, 1
      %p131 = por %p129, %p130
      %p133 = scmp.ne.s32.totalorder %s116, %s132
      %p134 = scmp.eq.s32.totalorder %s26, 0
      %p135 = por %p133, %p134
      %p136 = scmp.le.s32.totalorder 1, %s20
      %p137 = scmp.lt.s32.totalorder %s20, 3
      %p138 = pnand %p136, %p137
      %p139 = pneg %p138
      // Predicated region
      $region9: #{tpu_custom_call.1} parent=5 // pred_check
        _
      $region10: #{tpu_custom_call.1} parent=5 // pred_check_branch
        %141 = sbr.rel (%p138) target = $region12
      $region11: #{tpu_custom_call.1} parent=5 // pred_region
        %s142 = ssub.s32 %s20, 1
        // Predicated region
        $region13: #{tpu_custom_call.1} parent=11 // pred_check
          %p143 = pneg %p81
        $region14: #{tpu_custom_call.1} parent=11 // pred_check_branch
          %145 = sbr.rel (%p143) target = $region16
        $region15: #{tpu_custom_call.1} parent=11 // pred_region
          _
        $region16: #{tpu_custom_call.1} parent=11 // pred_fallthru
          _
        // Predicated region
        $region17: #{tpu_custom_call.1} parent=11 // pred_check
          %p146 = pneg %p102
        $region18: #{tpu_custom_call.1} parent=11 // pred_check_branch
          %148 = sbr.rel (%p146) target = $region20
        $region19: #{tpu_custom_call.1} parent=11 // pred_region
          _
        $region20: #{tpu_custom_call.1} parent=11 // pred_fallthru
          _
      $region12: #{tpu_custom_call.1} parent=5 // pred_fallthru
        _
      %p149 = scmp.lt.s32.totalorder %s20, 2
      // Predicated region
      $region21: #{tpu_custom_call.1} parent=5 // pred_check
        %p150 = pneg %p149
      $region22: #{tpu_custom_call.1} parent=5 // pred_check_branch
        %152 = sbr.rel (%p150) target = $region24
      $region23: #{tpu_custom_call.1} parent=5 // pred_region
        // Predicated region
        $region25: #{tpu_custom_call.1} parent=23 // pred_check
          %p153 = pneg %p54
        $region26: #{tpu_custom_call.1} parent=23 // pred_check_branch
          %155 = sbr.rel (%p153) target = $region28
        $region27: #{tpu_custom_call.1} parent=23 // pred_region
          %s156 = sand.u32 %s44, 1
          %s157 = scalar_lea.sflag [#allocation7], %s156
          %s158 = sand.u32 %s44, 1
          %s159 = smul.addr %s158, 8
          %s160 = scalar_lea.vmem [#allocation6], %s159
          %s162 = ssub.s32 128, 128
          %163 = vsyncadd %s157, %s162
          %s164 = smul.addr %s28, 2
          %s165 = smul.addr %s27, 2
          %s166 = sadd.s32 %s164, %s165
          %s167 = smul.addr %s166, 64
          %s168 = scalar_lea.hbm %s1, %s167
          %s170 = sshll.u32 %s160, 4
          %s171 = int_to_ptr.vmem [resolvable:$true] %s170
          %173 = dma.hbm_to_vmem [thread:$0]  %s168, 128, %s171, %s157
        $region28: #{tpu_custom_call.1} parent=23 // pred_fallthru
          _
      $region24: #{tpu_custom_call.1} parent=5 // pred_fallthru
        _
      %p174 = scmp.le.s32.totalorder 1, %s20
      %p175 = scmp.lt.s32.totalorder %s20, 3
      %p176 = pnand %p174, %p175
      %p177 = pneg %p176
      // Predicated region
      $region29: #{tpu_custom_call.1} parent=5 // pred_check
        _
      $region30: #{tpu_custom_call.1} parent=5 // pred_check_branch
        %179 = sbr.rel (%p176) target = $region32
      $region31: #{tpu_custom_call.1} parent=5 // pred_region
        %s180 = ssub.s32 %s20, 1
        %s181 = sand.u32 %s47, 1
        %s182 = scalar_lea.sflag [#allocation7], %s181
        %s183 = sand.u32 %s47, 1
        %s184 = smul.addr %s183, 8
        %s185 = scalar_lea.vmem [#allocation6], %s184
        // Predicated region
        $region33: #{tpu_custom_call.1} parent=31 // pred_check
          %p186 = pneg %p60
        $region34: #{tpu_custom_call.1} parent=31 // pred_check_branch
          %188 = sbr.rel (%p186) target = $region36
        $region35: #{tpu_custom_call.1} parent=31 // pred_region
          %189 = dma.done %s182, 128
        $region36: #{tpu_custom_call.1} parent=31 // pred_fallthru
          _
        %s190 = sand.u32 %s47, 1
        %s191 = scalar_lea.sflag [#allocation7], %s190
        %s192 = sand.u32 %s47, 1
        %s193 = smul.addr %s192, 8
        %s194 = scalar_lea.vmem [#allocation6], %s193
        %p195 = pneg %p60
        %p196 = pneg %p57
        %p197 = pneg %p81
        %p198 = pneg %p78
        %p199 = pneg %p102
        %p200 = pneg %p99
        %p201 = pneg %p128
        %p202 = pneg %p125
        %s203 = sand.u32 %s115, 1
        %s204 = scalar_lea.sflag [#allocation8], %s203
        %s205 = sand.u32 %s115, 1
        %s206 = smul.addr %s205, 2
        %s207 = scalar_lea.vmem [#allocation9], %s206
        %v208 = vld [vmem:[%s185] sm:$0xff]
        %v210 = vcombine.high %v208, %v208
        %vm212 = vcmask 1043456
        %v213 = vsel %vm212, %v208, 0.0
        %v214 = vrot.slane %v213, 4
        %v215 = vadd.f32 %v213, %v214
        %v216 = vrot.slane %v215, 2
        %v217 = vadd.f32 %v215, %v216
        %v218 = vrot.slane %v217, 1
        %v219 = vadd.f32 %v217, %v218
        %v220 = vsel %vm212, %v210, 0.0
        %v221 = vrot.slane %v220, 4
        %v222 = vadd.f32 %v220, %v221
        %v223 = vrot.slane %v222, 2
        %v224 = vadd.f32 %v222, %v223
        %v225 = vrot.slane %v224, 1
        %v226 = vadd.f32 %v224, %v225
        %v227 = vsel %vm212, %v208, -inf
        %v228 = vrot.slane %v227, 4
        %v229 = vmax.f32 %v227, %v228
        %v230 = vrot.slane %v229, 2
        %v231 = vmax.f32 %v229, %v230
        %v232 = vrot.slane %v231, 1
        %v233 = vmax.f32 %v231, %v232
        %v234 = vsel %vm212, %v210, -inf
        %v235 = vrot.slane %v234, 4
        %v236 = vmax.f32 %v234, %v235
        %v237 = vrot.slane %v236, 2
        %v238 = vmax.f32 %v236, %v237
        %v239 = vrot.slane %v238, 1
        %v240 = vmax.f32 %v238, %v239
        %p241 = scmp.eq.s32.totalorder %s30, 0
        // Predicated region
        $region37: #{tpu_custom_call.1} parent=31 // pred_check
          %p242 = pneg %p241
        $region38: #{tpu_custom_call.1} parent=31 // pred_check_branch
          %244 = sbr.rel (%p242) target = $region40
        $region39: #{tpu_custom_call.1} parent=31 // pred_region
          %v247 = vcombine.low %v219, %v226
          %v249 = vunpack.c.l.s4 1966171168
          %v250 = vunpack.c.0.s8 %v249
          %v251 = vlaneseq
          %v252 = vshrl.u32 %v251, 7
          %v253 = vsub.s32 %v250, %v252
          %v254 = vrot.slane %v247, %v253
          %v256 = vunpack.c.l.s4 1966171168
          %v257 = vunpack.c.0.s8 %v256
          %v258 = vlaneseq
          %v259 = vshrl.u32 %v258, 7
          %v260 = vsub.s32 %v257, %v259
          %v261 = vrot.slane %v254, %v260
          %v263 = vlaneseq
          %vm264 = vcmp.ge.s32.totalorder %v263, 0
          %vm265 = vcmp.lt.s32.totalorder %v263, 256
          %vm266 = vmand %vm264, %vm265
          %267 = vst.msk [vmem:[#allocation2] sm:$0x3] %vm266, %v261
          %v270 = vcombine.low %v233, %v240
          %v272 = vunpack.c.l.s4 1966171168
          %v273 = vunpack.c.0.s8 %v272
          %v274 = vlaneseq
          %v275 = vshrl.u32 %v274, 7
          %v276 = vsub.s32 %v273, %v275
          %v277 = vrot.slane %v270, %v276
          %v279 = vunpack.c.l.s4 1966171168
          %v280 = vunpack.c.0.s8 %v279
          %v281 = vlaneseq
          %v282 = vshrl.u32 %v281, 7
          %v283 = vsub.s32 %v280, %v282
          %v284 = vrot.slane %v277, %v283
          %286 = vst.msk [vmem:[#allocation3] sm:$0x3] %vm266, %v284
        $region40: #{tpu_custom_call.1} parent=31 // pred_fallthru
          _
        %p287 = scmp.ne.s32.totalorder %s30, 0
        // Predicated region
        $region41: #{tpu_custom_call.1} parent=31 // pred_check
          %p288 = pneg %p287
        $region42: #{tpu_custom_call.1} parent=31 // pred_check_branch
          %290 = sbr.rel (%p288) target = $region44
        $region43: #{tpu_custom_call.1} parent=31 // pred_region
          %v291 = vld [vmem:[#allocation2] sm:$0x3]
          %v294 = vcombine.low %v219, %v226
          %v296 = vunpack.c.l.s4 1966171168
          %v297 = vunpack.c.0.s8 %v296
          %v298 = vlaneseq
          %v299 = vshrl.u32 %v298, 7
          %v300 = vsub.s32 %v297, %v299
          %v301 = vrot.slane %v294, %v300
          %v303 = vunpack.c.l.s4 1966171168
          %v304 = vunpack.c.0.s8 %v303
          %v305 = vlaneseq
          %v306 = vshrl.u32 %v305, 7
          %v307 = vsub.s32 %v304, %v306
          %v308 = vrot.slane %v301, %v307
          %v310 = vadd.f32 %v291, %v308
          %v311 = vlaneseq
          %vm312 = vcmp.ge.s32.totalorder %v311, 0
          %vm313 = vcmp.lt.s32.totalorder %v311, 256
          %vm314 = vmand %vm312, %vm313
          %315 = vst.msk [vmem:[#allocation2] sm:$0x3] %vm314, %v310
          %v316 = vld [vmem:[#allocation3] sm:$0x3]
          %v319 = vcombine.low %v233, %v240
          %v321 = vunpack.c.l.s4 1966171168
          %v322 = vunpack.c.0.s8 %v321
          %v323 = vlaneseq
          %v324 = vshrl.u32 %v323, 7
          %v325 = vsub.s32 %v322, %v324
          %v326 = vrot.slane %v319, %v325
          %v328 = vunpack.c.l.s4 1966171168
          %v329 = vunpack.c.0.s8 %v328
          %v330 = vlaneseq
          %v331 = vshrl.u32 %v330, 7
          %v332 = vsub.s32 %v329, %v331
          %v333 = vrot.slane %v326, %v332
          %v335 = vmax.f32 %v316, %v333
          %336 = vst.msk [vmem:[#allocation3] sm:$0x3] %vm314, %v335
        $region44: #{tpu_custom_call.1} parent=31 // pred_fallthru
          _
        // Predicated region
        $region45: #{tpu_custom_call.1} parent=31 // pred_check
          %p337 = pneg %p241
        $region46: #{tpu_custom_call.1} parent=31 // pred_check_branch
          %339 = sbr.rel (%p337) target = $region48
        $region47: #{tpu_custom_call.1} parent=31 // pred_region
          %v340 = vld [vmem:[#allocation2] sm:$0x3]
          %v341 = vmul.f32 %v340, 0.25
          %v342 = vld [vmem:[#allocation3] sm:$0x3]
          %v343 = vld [vmem:[%s2] sm:$0x3]
          %v344 = vld [vmem:[%s3] sm:$0x3]
          %vm345 = vcmp.ge.s32.totalorder %v343, 3
          %vm346 = vcmp.lt.s32.totalorder %v343, 19
          %vm347 = vmand %vm345, %vm346
          %v349 = vlaneseq
          %v350 = vshrl.u32 %v349, 7
          %v351 = vsub.s32 0, %v350
          %v352 = vrot.slane %v341, %v351
          %v353 = vlaneseq
          %v354 = vshrl.u32 %v353, 7
          %v355 = vsub.s32 1, %v354
          %v356 = vrot.slane %v341, %v355
          %359 = vrot.lane.b32.xlu0 %v352, 3
          %v360 = vpop.permute.xlu0 %359
          %361 = vrot.lane.b32.xlu0 %v356, 3
          %v362 = vpop.permute.xlu0 %361
          %v363 = vlaneseq
          %v364 = vand.u32 %v363, 127
          %vm365 = vcmp.lt.s32.totalorder %v364, 3
          %v366 = vsel %vm365, %v360, %v362
          %v367 = vsel %vm365, %v362, %v360
          %v370 = vcombine.low %v367, %v366
          %v372 = vunpack.c.l.s4 1966171168
          %v373 = vunpack.c.0.s8 %v372
          %v374 = vlaneseq
          %v375 = vshrl.u32 %v374, 7
          %v376 = vsub.s32 %v373, %v375
          %v377 = vrot.slane %v370, %v376
          %v379 = vunpack.c.l.s4 1966171168
          %v380 = vunpack.c.0.s8 %v379
          %v381 = vlaneseq
          %v382 = vshrl.u32 %v381, 7
          %v383 = vsub.s32 %v380, %v382
          %v384 = vrot.slane %v377, %v383
          %v386 = vsel %vm347, %v384, 0.0
          %v388 = vlaneseq
          %v389 = vshrl.u32 %v388, 7
          %v390 = vsub.s32 0, %v389
          %v391 = vrot.slane %v342, %v390
          %v392 = vlaneseq
          %v393 = vshrl.u32 %v392, 7
          %v394 = vsub.s32 1, %v393
          %v395 = vrot.slane %v342, %v394
          %398 = vrot.lane.b32.xlu0 %v391, 3
          %v399 = vpop.permute.xlu0 %398
          %400 = vrot.lane.b32.xlu0 %v395, 3
          %v401 = vpop.permute.xlu0 %400
          %v402 = vsel %vm365, %v399, %v401
          %v403 = vsel %vm365, %v401, %v399
          %v406 = vcombine.low %v403, %v402
          %v408 = vunpack.c.l.s4 1966171168
          %v409 = vunpack.c.0.s8 %v408
          %v410 = vlaneseq
          %v411 = vshrl.u32 %v410, 7
          %v412 = vsub.s32 %v409, %v411
          %v413 = vrot.slane %v406, %v412
          %v415 = vunpack.c.l.s4 1966171168
          %v416 = vunpack.c.0.s8 %v415
          %v417 = vlaneseq
          %v418 = vshrl.u32 %v417, 7
          %v419 = vsub.s32 %v416, %v418
          %v420 = vrot.slane %v413, %v419
          %v422 = vsel %vm347, %v420, 0.0
          %s423 = sld [smem:[#allocation5]]
          %s424 = sld [smem:[#allocation5 + $0x31]]
          %v425 = vstv %s423
          %v426 = vmul.f32 %v425, %v386
          %v427 = vstv %s424
          %v428 = vmul.f32 %v427, %v422
          %v429 = vadd.f32 %v426, %v428
          %s430 = sld [smem:[#allocation5 + $0x7]]
          %s431 = sld [smem:[#allocation5 + $0x38]]
          %v432 = vstv %s430
          %v433 = vmul.f32 %v432, %v386
          %v434 = vstv %s431
          %v435 = vmul.f32 %v434, %v422
          %v436 = vadd.f32 %v433, %v435
          %s437 = sld [smem:[#allocation5 + $0xe]]
          %s438 = sld [smem:[#allocation5 + $0x3f]]
          %v439 = vstv %s437
          %v440 = vmul.f32 %v439, %v386
          %v441 = vstv %s438
          %v442 = vmul.f32 %v441, %v422
          %v443 = vadd.f32 %v440, %v442
          %s444 = sld [smem:[#allocation5 + $0x15]]
          %s445 = sld [smem:[#allocation5 + $0x46]]
          %v446 = vstv %s444
          %v447 = vmul.f32 %v446, %v386
          %v448 = vstv %s445
          %v449 = vmul.f32 %v448, %v422
          %v450 = vadd.f32 %v447, %v449
          %s451 = sld [smem:[#allocation5 + $0x1c]]
          %s452 = sld [smem:[#allocation5 + $0x4d]]
          %v453 = vstv %s451
          %v454 = vmul.f32 %v453, %v386
          %v455 = vstv %s452
          %v456 = vmul.f32 %v455, %v422
          %v457 = vadd.f32 %v454, %v456
          %s458 = sld [smem:[#allocation5 + $0x23]]
          %s459 = sld [smem:[#allocation5 + $0x54]]
          %v460 = vstv %s458
          %v461 = vmul.f32 %v460, %v386
          %v462 = vstv %s459
          %v463 = vmul.f32 %v462, %v422
          %v464 = vadd.f32 %v461, %v463
          %s465 = sld [smem:[#allocation5 + $0x2a]]
          %s466 = sld [smem:[#allocation5 + $0x5b]]
          %v467 = vstv %s465
          %v468 = vmul.f32 %v467, %v386
          %v469 = vstv %s466
          %v470 = vmul.f32 %v469, %v422
          %v471 = vadd.f32 %v468, %v470
          %vm472 = vcmp.ge.s32.totalorder %v343, 2
          %vm473 = vcmp.lt.s32.totalorder %v343, 18
          %vm474 = vmand %vm472, %vm473
          %475 = vrot.lane.b32.xlu0 %v352, 2
          %v476 = vpop.permute.xlu0 %475
          %477 = vrot.lane.b32.xlu0 %v356, 2
          %v478 = vpop.permute.xlu0 %477
          %vm479 = vcmp.lt.s32.totalorder %v364, 2
          %v480 = vsel %vm479, %v476, %v478
          %v481 = vsel %vm479, %v478, %v476
          %v484 = vcombine.low %v481, %v480
          %v486 = vunpack.c.l.s4 1966171168
          %v487 = vunpack.c.0.s8 %v486
          %v488 = vlaneseq
          %v489 = vshrl.u32 %v488, 7
          %v490 = vsub.s32 %v487, %v489
          %v491 = vrot.slane %v484, %v490
          %v493 = vunpack.c.l.s4 1966171168
          %v494 = vunpack.c.0.s8 %v493
          %v495 = vlaneseq
          %v496 = vshrl.u32 %v495, 7
          %v497 = vsub.s32 %v494, %v496
          %v498 = vrot.slane %v491, %v497
          %v500 = vsel %vm474, %v498, 0.0
          %501 = vrot.lane.b32.xlu0 %v391, 2
          %v502 = vpop.permute.xlu0 %501
          %503 = vrot.lane.b32.xlu0 %v395, 2
          %v504 = vpop.permute.xlu0 %503
          %v505 = vsel %vm479, %v502, %v504
          %v506 = vsel %vm479, %v504, %v502
          %v509 = vcombine.low %v506, %v505
          %v511 = vunpack.c.l.s4 1966171168
          %v512 = vunpack.c.0.s8 %v511
          %v513 = vlaneseq
          %v514 = vshrl.u32 %v513, 7
          %v515 = vsub.s32 %v512, %v514
          %v516 = vrot.slane %v509, %v515
          %v518 = vunpack.c.l.s4 1966171168
          %v519 = vunpack.c.0.s8 %v518
          %v520 = vlaneseq
          %v521 = vshrl.u32 %v520, 7
          %v522 = vsub.s32 %v519, %v521
          %v523 = vrot.slane %v516, %v522
          %v525 = vsel %vm474, %v523, 0.0
          %s526 = sld [smem:[#allocation5 + $0x1]]
          %s527 = sld [smem:[#allocation5 + $0x32]]
          %v528 = vstv %s526
          %v529 = vmul.f32 %v528, %v500
          %v530 = vstv %s527
          %v531 = vmul.f32 %v530, %v525
          %v532 = vadd.f32 %v529, %v531
          %v533 = vadd.f32 %v429, %v532
          %s534 = sld [smem:[#allocation5 + $0x8]]
          %s535 = sld [smem:[#allocation5 + $0x39]]
          %v536 = vstv %s534
          %v537 = vmul.f32 %v536, %v500
          %v538 = vstv %s535
          %v539 = vmul.f32 %v538, %v525
          %v540 = vadd.f32 %v537, %v539
          %v541 = vadd.f32 %v436, %v540
          %s542 = sld [smem:[#allocation5 + $0xf]]
          %s543 = sld [smem:[#allocation5 + $0x40]]
          %v544 = vstv %s542
          %v545 = vmul.f32 %v544, %v500
          %v546 = vstv %s543
          %v547 = vmul.f32 %v546, %v525
          %v548 = vadd.f32 %v545, %v547
          %v549 = vadd.f32 %v443, %v548
          %s550 = sld [smem:[#allocation5 + $0x16]]
          %s551 = sld [smem:[#allocation5 + $0x47]]
          %v552 = vstv %s550
          %v553 = vmul.f32 %v552, %v500
          %v554 = vstv %s551
          %v555 = vmul.f32 %v554, %v525
          %v556 = vadd.f32 %v553, %v555
          %v557 = vadd.f32 %v450, %v556
          %s558 = sld [smem:[#allocation5 + $0x1d]]
          %s559 = sld [smem:[#allocation5 + $0x4e]]
          %v560 = vstv %s558
          %v561 = vmul.f32 %v560, %v500
          %v562 = vstv %s559
          %v563 = vmul.f32 %v562, %v525
          %v564 = vadd.f32 %v561, %v563
          %v565 = vadd.f32 %v457, %v564
          %s566 = sld [smem:[#allocation5 + $0x24]]
          %s567 = sld [smem:[#allocation5 + $0x55]]
          %v568 = vstv %s566
          %v569 = vmul.f32 %v568, %v500
          %v570 = vstv %s567
          %v571 = vmul.f32 %v570, %v525
          %v572 = vadd.f32 %v569, %v571
          %v573 = vadd.f32 %v464, %v572
          %s574 = sld [smem:[#allocation5 + $0x2b]]
          %s575 = sld [smem:[#allocation5 + $0x5c]]
          %v576 = vstv %s574
          %v577 = vmul.f32 %v576, %v500
          %v578 = vstv %s575
          %v579 = vmul.f32 %v578, %v525
          %v580 = vadd.f32 %v577, %v579
          %v581 = vadd.f32 %v471, %v580
          %vm582 = vcmp.ge.s32.totalorder %v343, 1
          %vm583 = vcmp.lt.s32.totalorder %v343, 17
          %vm584 = vmand %vm582, %vm583
          %585 = vrot.lane.b32.xlu0 %v352, 1
          %v586 = vpop.permute.xlu0 %585
          %587 = vrot.lane.b32.xlu0 %v356, 1
          %v588 = vpop.permute.xlu0 %587
          %vm589 = vcmp.lt.s32.totalorder %v364, 1
          %v590 = vsel %vm589, %v586, %v588
          %v591 = vsel %vm589, %v588, %v586
          %v594 = vcombine.low %v591, %v590
          %v596 = vunpack.c.l.s4 1966171168
          %v597 = vunpack.c.0.s8 %v596
          %v598 = vlaneseq
          %v599 = vshrl.u32 %v598, 7
          %v600 = vsub.s32 %v597, %v599
          %v601 = vrot.slane %v594, %v600
          %v603 = vunpack.c.l.s4 1966171168
          %v604 = vunpack.c.0.s8 %v603
          %v605 = vlaneseq
          %v606 = vshrl.u32 %v605, 7
          %v607 = vsub.s32 %v604, %v606
          %v608 = vrot.slane %v601, %v607
          %v610 = vsel %vm584, %v608, 0.0
          %611 = vrot.lane.b32.xlu0 %v391, 1
          %v612 = vpop.permute.xlu0 %611
          %613 = vrot.lane.b32.xlu0 %v395, 1
          %v614 = vpop.permute.xlu0 %613
          %v615 = vsel %vm589, %v612, %v614
          %v616 = vsel %vm589, %v614, %v612
          %v619 = vcombine.low %v616, %v615
          %v621 = vunpack.c.l.s4 1966171168
          %v622 = vunpack.c.0.s8 %v621
          %v623 = vlaneseq
          %v624 = vshrl.u32 %v623, 7
          %v625 = vsub.s32 %v622, %v624
          %v626 = vrot.slane %v619, %v625
          %v628 = vunpack.c.l.s4 1966171168
          %v629 = vunpack.c.0.s8 %v628
          %v630 = vlaneseq
          %v631 = vshrl.u32 %v630, 7
          %v632 = vsub.s32 %v629, %v631
          %v633 = vrot.slane %v626, %v632
          %v635 = vsel %vm584, %v633, 0.0
          %s636 = sld [smem:[#allocation5 + $0x2]]
          %s637 = sld [smem:[#allocation5 + $0x33]]
          %v638 = vstv %s636
          %v639 = vmul.f32 %v638, %v610
          %v640 = vstv %s637
          %v641 = vmul.f32 %v640, %v635
          %v642 = vadd.f32 %v639, %v641
          %v643 = vadd.f32 %v533, %v642
          %s644 = sld [smem:[#allocation5 + $0x9]]
          %s645 = sld [smem:[#allocation5 + $0x3a]]
          %v646 = vstv %s644
          %v647 = vmul.f32 %v646, %v610
          %v648 = vstv %s645
          %v649 = vmul.f32 %v648, %v635
          %v650 = vadd.f32 %v647, %v649
          %v651 = vadd.f32 %v541, %v650
          %s652 = sld [smem:[#allocation5 + $0x10]]
          %s653 = sld [smem:[#allocation5 + $0x41]]
          %v654 = vstv %s652
          %v655 = vmul.f32 %v654, %v610
          %v656 = vstv %s653
          %v657 = vmul.f32 %v656, %v635
          %v658 = vadd.f32 %v655, %v657
          %v659 = vadd.f32 %v549, %v658
          %s660 = sld [smem:[#allocation5 + $0x17]]
          %s661 = sld [smem:[#allocation5 + $0x48]]
          %v662 = vstv %s660
          %v663 = vmul.f32 %v662, %v610
          %v664 = vstv %s661
          %v665 = vmul.f32 %v664, %v635
          %v666 = vadd.f32 %v663, %v665
          %v667 = vadd.f32 %v557, %v666
          %s668 = sld [smem:[#allocation5 + $0x1e]]
          %s669 = sld [smem:[#allocation5 + $0x4f]]
          %v670 = vstv %s668
          %v671 = vmul.f32 %v670, %v610
          %v672 = vstv %s669
          %v673 = vmul.f32 %v672, %v635
          %v674 = vadd.f32 %v671, %v673
          %v675 = vadd.f32 %v565, %v674
          %s676 = sld [smem:[#allocation5 + $0x25]]
          %s677 = sld [smem:[#allocation5 + $0x56]]
          %v678 = vstv %s676
          %v679 = vmul.f32 %v678, %v610
          %v680 = vstv %s677
          %v681 = vmul.f32 %v680, %v635
          %v682 = vadd.f32 %v679, %v681
          %v683 = vadd.f32 %v573, %v682
          %s684 = sld [smem:[#allocation5 + $0x2c]]
          %s685 = sld [smem:[#allocation5 + $0x5d]]
          %v686 = vstv %s684
          %v687 = vmul.f32 %v686, %v610
          %v688 = vstv %s685
          %v689 = vmul.f32 %v688, %v635
          %v690 = vadd.f32 %v687, %v689
          %v691 = vadd.f32 %v581, %v690
          %s692 = sld [smem:[#allocation5 + $0x3]]
          %s693 = sld [smem:[#allocation5 + $0x34]]
          %v694 = vstv %s692
          %v695 = vmul.f32 %v694, %v341
          %v696 = vstv %s693
          %v697 = vmul.f32 %v696, %v342
          %v698 = vadd.f32 %v695, %v697
          %v699 = vadd.f32 %v643, %v698
          %s700 = sld [smem:[#allocation5 + $0xa]]
          %s701 = sld [smem:[#allocation5 + $0x3b]]
          %v702 = vstv %s700
          %v703 = vmul.f32 %v702, %v341
          %v704 = vstv %s701
          %v705 = vmul.f32 %v704, %v342
          %v706 = vadd.f32 %v703, %v705
          %v707 = vadd.f32 %v651, %v706
          %s708 = sld [smem:[#allocation5 + $0x11]]
          %s709 = sld [smem:[#allocation5 + $0x42]]
          %v710 = vstv %s708
          %v711 = vmul.f32 %v710, %v341
          %v712 = vstv %s709
          %v713 = vmul.f32 %v712, %v342
          %v714 = vadd.f32 %v711, %v713
          %v715 = vadd.f32 %v659, %v714
          %s716 = sld [smem:[#allocation5 + $0x18]]
          %s717 = sld [smem:[#allocation5 + $0x49]]
          %v718 = vstv %s716
          %v719 = vmul.f32 %v718, %v341
          %v720 = vstv %s717
          %v721 = vmul.f32 %v720, %v342
          %v722 = vadd.f32 %v719, %v721
          %v723 = vadd.f32 %v667, %v722
          %s724 = sld [smem:[#allocation5 + $0x1f]]
          %s725 = sld [smem:[#allocation5 + $0x50]]
          %v726 = vstv %s724
          %v727 = vmul.f32 %v726, %v341
          %v728 = vstv %s725
          %v729 = vmul.f32 %v728, %v342
          %v730 = vadd.f32 %v727, %v729
          %v731 = vadd.f32 %v675, %v730
          %s732 = sld [smem:[#allocation5 + $0x26]]
          %s733 = sld [smem:[#allocation5 + $0x57]]
          %v734 = vstv %s732
          %v735 = vmul.f32 %v734, %v341
          %v736 = vstv %s733
          %v737 = vmul.f32 %v736, %v342
          %v738 = vadd.f32 %v735, %v737
          %v739 = vadd.f32 %v683, %v738
          %s740 = sld [smem:[#allocation5 + $0x2d]]
          %s741 = sld [smem:[#allocation5 + $0x5e]]
          %v742 = vstv %s740
          %v743 = vmul.f32 %v742, %v341
          %v744 = vstv %s741
          %v745 = vmul.f32 %v744, %v342
          %v746 = vadd.f32 %v743, %v745
          %v747 = vadd.f32 %v691, %v746
          %vm748 = vcmp.ge.s32.totalorder %v343, 4294967295
          %vm749 = vcmp.lt.s32.totalorder %v343, 15
          %vm750 = vmand %vm748, %vm749
          %751 = vrot.lane.b32.xlu0 %v352, 127
          %v752 = vpop.permute.xlu0 %751
          %753 = vrot.lane.b32.xlu0 %v356, 127
          %v754 = vpop.permute.xlu0 %753
          %vm755 = vcmp.lt.s32.totalorder %v364, 127
          %v756 = vsel %vm755, %v752, %v754
          %v757 = vsel %vm755, %v754, %v752
          %v760 = vcombine.low %v756, %v757
          %v762 = vunpack.c.l.s4 1966171168
          %v763 = vunpack.c.0.s8 %v762
          %v764 = vlaneseq
          %v765 = vshrl.u32 %v764, 7
          %v766 = vsub.s32 %v763, %v765
          %v767 = vrot.slane %v760, %v766
          %v769 = vunpack.c.l.s4 1966171168
          %v770 = vunpack.c.0.s8 %v769
          %v771 = vlaneseq
          %v772 = vshrl.u32 %v771, 7
          %v773 = vsub.s32 %v770, %v772
          %v774 = vrot.slane %v767, %v773
          %v776 = vsel %vm750, %v774, 0.0
          %777 = vrot.lane.b32.xlu0 %v391, 127
          %v778 = vpop.permute.xlu0 %777
          %779 = vrot.lane.b32.xlu0 %v395, 127
          %v780 = vpop.permute.xlu0 %779
          %v781 = vsel %vm755, %v778, %v780
          %v782 = vsel %vm755, %v780, %v778
          %v785 = vcombine.low %v781, %v782
          %v787 = vunpack.c.l.s4 1966171168
          %v788 = vunpack.c.0.s8 %v787
          %v789 = vlaneseq
          %v790 = vshrl.u32 %v789, 7
          %v791 = vsub.s32 %v788, %v790
          %v792 = vrot.slane %v785, %v791
          %v794 = vunpack.c.l.s4 1966171168
          %v795 = vunpack.c.0.s8 %v794
          %v796 = vlaneseq
          %v797 = vshrl.u32 %v796, 7
          %v798 = vsub.s32 %v795, %v797
          %v799 = vrot.slane %v792, %v798
          %v801 = vsel %vm750, %v799, 0.0
          %s802 = sld [smem:[#allocation5 + $0x4]]
          %s803 = sld [smem:[#allocation5 + $0x35]]
          %v804 = vstv %s802
          %v805 = vmul.f32 %v804, %v776
          %v806 = vstv %s803
          %v807 = vmul.f32 %v806, %v801
          %v808 = vadd.f32 %v805, %v807
          %v809 = vadd.f32 %v699, %v808
          %s810 = sld [smem:[#allocation5 + $0xb]]
          %s811 = sld [smem:[#allocation5 + $0x3c]]
          %v812 = vstv %s810
          %v813 = vmul.f32 %v812, %v776
          %v814 = vstv %s811
          %v815 = vmul.f32 %v814, %v801
          %v816 = vadd.f32 %v813, %v815
          %v817 = vadd.f32 %v707, %v816
          %s818 = sld [smem:[#allocation5 + $0x12]]
          %s819 = sld [smem:[#allocation5 + $0x43]]
          %v820 = vstv %s818
          %v821 = vmul.f32 %v820, %v776
          %v822 = vstv %s819
          %v823 = vmul.f32 %v822, %v801
          %v824 = vadd.f32 %v821, %v823
          %v825 = vadd.f32 %v715, %v824
          %s826 = sld [smem:[#allocation5 + $0x19]]
          %s827 = sld [smem:[#allocation5 + $0x4a]]
          %v828 = vstv %s826
          %v829 = vmul.f32 %v828, %v776
          %v830 = vstv %s827
          %v831 = vmul.f32 %v830, %v801
          %v832 = vadd.f32 %v829, %v831
          %v833 = vadd.f32 %v723, %v832
          %s834 = sld [smem:[#allocation5 + $0x20]]
          %s835 = sld [smem:[#allocation5 + $0x51]]
          %v836 = vstv %s834
          %v837 = vmul.f32 %v836, %v776
          %v838 = vstv %s835
          %v839 = vmul.f32 %v838, %v801
          %v840 = vadd.f32 %v837, %v839
          %v841 = vadd.f32 %v731, %v840
          %s842 = sld [smem:[#allocation5 + $0x27]]
          %s843 = sld [smem:[#allocation5 + $0x58]]
          %v844 = vstv %s842
          %v845 = vmul.f32 %v844, %v776
          %v846 = vstv %s843
          %v847 = vmul.f32 %v846, %v801
          %v848 = vadd.f32 %v845, %v847
          %v849 = vadd.f32 %v739, %v848
          %s850 = sld [smem:[#allocation5 + $0x2e]]
          %s851 = sld [smem:[#allocation5 + $0x5f]]
          %v852 = vstv %s850
          %v853 = vmul.f32 %v852, %v776
          %v854 = vstv %s851
          %v855 = vmul.f32 %v854, %v801
          %v856 = vadd.f32 %v853, %v855
          %v857 = vadd.f32 %v747, %v856
          %vm858 = vcmp.ge.s32.totalorder %v343, 4294967294
          %vm859 = vcmp.lt.s32.totalorder %v343, 14
          %vm860 = vmand %vm858, %vm859
          %861 = vrot.lane.b32.xlu0 %v352, 126
          %v862 = vpop.permute.xlu0 %861
          %863 = vrot.lane.b32.xlu0 %v356, 126
          %v864 = vpop.permute.xlu0 %863
          %vm865 = vcmp.lt.s32.totalorder %v364, 126
          %v866 = vsel %vm865, %v862, %v864
          %v867 = vsel %vm865, %v864, %v862
          %v870 = vcombine.low %v866, %v867
          %v872 = vunpack.c.l.s4 1966171168
          %v873 = vunpack.c.0.s8 %v872
          %v874 = vlaneseq
          %v875 = vshrl.u32 %v874, 7
          %v876 = vsub.s32 %v873, %v875
          %v877 = vrot.slane %v870, %v876
          %v879 = vunpack.c.l.s4 1966171168
          %v880 = vunpack.c.0.s8 %v879
          %v881 = vlaneseq
          %v882 = vshrl.u32 %v881, 7
          %v883 = vsub.s32 %v880, %v882
          %v884 = vrot.slane %v877, %v883
          %v886 = vsel %vm860, %v884, 0.0
          %887 = vrot.lane.b32.xlu0 %v391, 126
          %v888 = vpop.permute.xlu0 %887
          %889 = vrot.lane.b32.xlu0 %v395, 126
          %v890 = vpop.permute.xlu0 %889
          %v891 = vsel %vm865, %v888, %v890
          %v892 = vsel %vm865, %v890, %v888
          %v895 = vcombine.low %v891, %v892
          %v897 = vunpack.c.l.s4 1966171168
          %v898 = vunpack.c.0.s8 %v897
          %v899 = vlaneseq
          %v900 = vshrl.u32 %v899, 7
          %v901 = vsub.s32 %v898, %v900
          %v902 = vrot.slane %v895, %v901
          %v904 = vunpack.c.l.s4 1966171168
          %v905 = vunpack.c.0.s8 %v904
          %v906 = vlaneseq
          %v907 = vshrl.u32 %v906, 7
          %v908 = vsub.s32 %v905, %v907
          %v909 = vrot.slane %v902, %v908
          %v911 = vsel %vm860, %v909, 0.0
          %s912 = sld [smem:[#allocation5 + $0x5]]
          %s913 = sld [smem:[#allocation5 + $0x36]]
          %v914 = vstv %s912
          %v915 = vmul.f32 %v914, %v886
          %v916 = vstv %s913
          %v917 = vmul.f32 %v916, %v911
          %v918 = vadd.f32 %v915, %v917
          %v919 = vadd.f32 %v809, %v918
          %s920 = sld [smem:[#allocation5 + $0xc]]
          %s921 = sld [smem:[#allocation5 + $0x3d]]
          %v922 = vstv %s920
          %v923 = vmul.f32 %v922, %v886
          %v924 = vstv %s921
          %v925 = vmul.f32 %v924, %v911
          %v926 = vadd.f32 %v923, %v925
          %v927 = vadd.f32 %v817, %v926
          %s928 = sld [smem:[#allocation5 + $0x13]]
          %s929 = sld [smem:[#allocation5 + $0x44]]
          %v930 = vstv %s928
          %v931 = vmul.f32 %v930, %v886
          %v932 = vstv %s929
          %v933 = vmul.f32 %v932, %v911
          %v934 = vadd.f32 %v931, %v933
          %v935 = vadd.f32 %v825, %v934
          %s936 = sld [smem:[#allocation5 + $0x1a]]
          %s937 = sld [smem:[#allocation5 + $0x4b]]
          %v938 = vstv %s936
          %v939 = vmul.f32 %v938, %v886
          %v940 = vstv %s937
          %v941 = vmul.f32 %v940, %v911
          %v942 = vadd.f32 %v939, %v941
          %v943 = vadd.f32 %v833, %v942
          %s944 = sld [smem:[#allocation5 + $0x21]]
          %s945 = sld [smem:[#allocation5 + $0x52]]
          %v946 = vstv %s944
          %v947 = vmul.f32 %v946, %v886
          %v948 = vstv %s945
          %v949 = vmul.f32 %v948, %v911
          %v950 = vadd.f32 %v947, %v949
          %v951 = vadd.f32 %v841, %v950
          %s952 = sld [smem:[#allocation5 + $0x28]]
          %s953 = sld [smem:[#allocation5 + $0x59]]
          %v954 = vstv %s952
          %v955 = vmul.f32 %v954, %v886
          %v956 = vstv %s953
          %v957 = vmul.f32 %v956, %v911
          %v958 = vadd.f32 %v955, %v957
          %v959 = vadd.f32 %v849, %v958
          %s960 = sld [smem:[#allocation5 + $0x2f]]
          %s961 = sld [smem:[#allocation5 + $0x60]]
          %v962 = vstv %s960
          %v963 = vmul.f32 %v962, %v886
          %v964 = vstv %s961
          %v965 = vmul.f32 %v964, %v911
          %v966 = vadd.f32 %v963, %v965
          %v967 = vadd.f32 %v857, %v966
          %vm968 = vcmp.ge.s32.totalorder %v343, 4294967293
          %vm969 = vcmp.lt.s32.totalorder %v343, 13
          %vm970 = vmand %vm968, %vm969
          %971 = vrot.lane.b32.xlu0 %v352, 125
          %v972 = vpop.permute.xlu0 %971
          %973 = vrot.lane.b32.xlu0 %v356, 125
          %v974 = vpop.permute.xlu0 %973
          %vm975 = vcmp.lt.s32.totalorder %v364, 125
          %v976 = vsel %vm975, %v972, %v974
          %v977 = vsel %vm975, %v974, %v972
          %v980 = vcombine.low %v976, %v977
          %v982 = vunpack.c.l.s4 1966171168
          %v983 = vunpack.c.0.s8 %v982
          %v984 = vlaneseq
          %v985 = vshrl.u32 %v984, 7
          %v986 = vsub.s32 %v983, %v985
          %v987 = vrot.slane %v980, %v986
          %v989 = vunpack.c.l.s4 1966171168
          %v990 = vunpack.c.0.s8 %v989
          %v991 = vlaneseq
          %v992 = vshrl.u32 %v991, 7
          %v993 = vsub.s32 %v990, %v992
          %v994 = vrot.slane %v987, %v993
          %v996 = vsel %vm970, %v994, 0.0
          %997 = vrot.lane.b32.xlu0 %v391, 125
          %v998 = vpop.permute.xlu0 %997
          %999 = vrot.lane.b32.xlu0 %v395, 125
          %v1000 = vpop.permute.xlu0 %999
          %v1001 = vsel %vm975, %v998, %v1000
          %v1002 = vsel %vm975, %v1000, %v998
          %v1005 = vcombine.low %v1001, %v1002
          %v1007 = vunpack.c.l.s4 1966171168
          %v1008 = vunpack.c.0.s8 %v1007
          %v1009 = vlaneseq
          %v1010 = vshrl.u32 %v1009, 7
          %v1011 = vsub.s32 %v1008, %v1010
          %v1012 = vrot.slane %v1005, %v1011
          %v1014 = vunpack.c.l.s4 1966171168
          %v1015 = vunpack.c.0.s8 %v1014
          %v1016 = vlaneseq
          %v1017 = vshrl.u32 %v1016, 7
          %v1018 = vsub.s32 %v1015, %v1017
          %v1019 = vrot.slane %v1012, %v1018
          %v1021 = vsel %vm970, %v1019, 0.0
          %s1022 = sld [smem:[#allocation5 + $0x6]]
          %s1023 = sld [smem:[#allocation5 + $0x37]]
          %v1024 = vstv %s1022
          %v1025 = vmul.f32 %v1024, %v996
          %v1026 = vstv %s1023
          %v1027 = vmul.f32 %v1026, %v1021
          %v1028 = vadd.f32 %v1025, %v1027
          %v1029 = vadd.f32 %v919, %v1028
          %s1030 = sld [smem:[#allocation5 + $0xd]]
          %s1031 = sld [smem:[#allocation5 + $0x3e]]
          %v1032 = vstv %s1030
          %v1033 = vmul.f32 %v1032, %v996
          %v1034 = vstv %s1031
          %v1035 = vmul.f32 %v1034, %v1021
          %v1036 = vadd.f32 %v1033, %v1035
          %v1037 = vadd.f32 %v927, %v1036
          %s1038 = sld [smem:[#allocation5 + $0x14]]
          %s1039 = sld [smem:[#allocation5 + $0x45]]
          %v1040 = vstv %s1038
          %v1041 = vmul.f32 %v1040, %v996
          %v1042 = vstv %s1039
          %v1043 = vmul.f32 %v1042, %v1021
          %v1044 = vadd.f32 %v1041, %v1043
          %v1045 = vadd.f32 %v935, %v1044
          %s1046 = sld [smem:[#allocation5 + $0x1b]]
          %s1047 = sld [smem:[#allocation5 + $0x4c]]
          %v1048 = vstv %s1046
          %v1049 = vmul.f32 %v1048, %v996
          %v1050 = vstv %s1047
          %v1051 = vmul.f32 %v1050, %v1021
          %v1052 = vadd.f32 %v1049, %v1051
          %v1053 = vadd.f32 %v943, %v1052
          %s1054 = sld [smem:[#allocation5 + $0x22]]
          %s1055 = sld [smem:[#allocation5 + $0x53]]
          %v1056 = vstv %s1054
          %v1057 = vmul.f32 %v1056, %v996
          %v1058 = vstv %s1055
          %v1059 = vmul.f32 %v1058, %v1021
          %v1060 = vadd.f32 %v1057, %v1059
          %v1061 = vadd.f32 %v951, %v1060
          %s1062 = sld [smem:[#allocation5 + $0x29]]
          %s1063 = sld [smem:[#allocation5 + $0x5a]]
          %v1064 = vstv %s1062
          %v1065 = vmul.f32 %v1064, %v996
          %v1066 = vstv %s1063
          %v1067 = vmul.f32 %v1066, %v1021
          %v1068 = vadd.f32 %v1065, %v1067
          %v1069 = vadd.f32 %v959, %v1068
          %s1070 = sld [smem:[#allocation5 + $0x30]]
          %s1071 = sld [smem:[#allocation5 + $0x61]]
          %v1072 = vstv %s1070
          %v1073 = vmul.f32 %v1072, %v996
          %v1074 = vstv %s1071
          %v1075 = vmul.f32 %v1074, %v1021
          %v1076 = vadd.f32 %v1073, %v1075
          %v1077 = vadd.f32 %v967, %v1076
          %vm1078 = vcmp.ge.s32.totalorder %v344, 3
          %vm1079 = vcmp.lt.s32.totalorder %v344, 19
          %vm1080 = vmand %vm1078, %vm1079
          %v1082 = vlaneseq
          %v1083 = vshrl.u32 %v1082, 7
          %v1084 = vsub.s32 0, %v1083
          %v1085 = vrot.slane %v1029, %v1084
          %v1086 = vlaneseq
          %v1087 = vshrl.u32 %v1086, 7
          %v1088 = vsub.s32 1, %v1087
          %v1089 = vrot.slane %v1029, %v1088
          %1092 = vrot.lane.b32.xlu0 %v1085, 48
          %v1093 = vpop.permute.xlu0 %1092
          %1094 = vrot.lane.b32.xlu0 %v1089, 48
          %v1095 = vpop.permute.xlu0 %1094
          %vm1096 = vcmp.lt.s32.totalorder %v364, 48
          %v1097 = vsel %vm1096, %v1093, %v1095
          %v1098 = vsel %vm1096, %v1095, %v1093
          %v1101 = vcombine.low %v1098, %v1097
          %v1103 = vunpack.c.l.s4 1966171168
          %v1104 = vunpack.c.0.s8 %v1103
          %v1105 = vlaneseq
          %v1106 = vshrl.u32 %v1105, 7
          %v1107 = vsub.s32 %v1104, %v1106
          %v1108 = vrot.slane %v1101, %v1107
          %v1110 = vunpack.c.l.s4 1966171168
          %v1111 = vunpack.c.0.s8 %v1110
          %v1112 = vlaneseq
          %v1113 = vshrl.u32 %v1112, 7
          %v1114 = vsub.s32 %v1111, %v1113
          %v1115 = vrot.slane %v1108, %v1114
          %v1117 = vsel %vm1080, %v1115, 0.0
          %vm1118 = vcmp.ge.s32.totalorder %v344, 2
          %vm1119 = vcmp.lt.s32.totalorder %v344, 18
          %vm1120 = vmand %vm1118, %vm1119
          %v1122 = vlaneseq
          %v1123 = vshrl.u32 %v1122, 7
          %v1124 = vsub.s32 0, %v1123
          %v1125 = vrot.slane %v1037, %v1124
          %v1126 = vlaneseq
          %v1127 = vshrl.u32 %v1126, 7
          %v1128 = vsub.s32 1, %v1127
          %v1129 = vrot.slane %v1037, %v1128
          %1132 = vrot.lane.b32.xlu0 %v1125, 32
          %v1133 = vpop.permute.xlu0 %1132
          %1134 = vrot.lane.b32.xlu0 %v1129, 32
          %v1135 = vpop.permute.xlu0 %1134
          %vm1136 = vcmp.lt.s32.totalorder %v364, 32
          %v1137 = vsel %vm1136, %v1133, %v1135
          %v1138 = vsel %vm1136, %v1135, %v1133
          %v1141 = vcombine.low %v1138, %v1137
          %v1143 = vunpack.c.l.s4 1966171168
          %v1144 = vunpack.c.0.s8 %v1143
          %v1145 = vlaneseq
          %v1146 = vshrl.u32 %v1145, 7
          %v1147 = vsub.s32 %v1144, %v1146
          %v1148 = vrot.slane %v1141, %v1147
          %v1150 = vunpack.c.l.s4 1966171168
          %v1151 = vunpack.c.0.s8 %v1150
          %v1152 = vlaneseq
          %v1153 = vshrl.u32 %v1152, 7
          %v1154 = vsub.s32 %v1151, %v1153
          %v1155 = vrot.slane %v1148, %v1154
          %v1157 = vsel %vm1120, %v1155, 0.0
          %v1158 = vadd.f32 %v1117, %v1157
          %vm1159 = vcmp.ge.s32.totalorder %v344, 1
          %vm1160 = vcmp.lt.s32.totalorder %v344, 17
          %vm1161 = vmand %vm1159, %vm1160
          %v1163 = vlaneseq
          %v1164 = vshrl.u32 %v1163, 7
          %v1165 = vsub.s32 0, %v1164
          %v1166 = vrot.slane %v1045, %v1165
          %v1167 = vlaneseq
          %v1168 = vshrl.u32 %v1167, 7
          %v1169 = vsub.s32 1, %v1168
          %v1170 = vrot.slane %v1045, %v1169
          %1173 = vrot.lane.b32.xlu0 %v1166, 16
          %v1174 = vpop.permute.xlu0 %1173
          %1175 = vrot.lane.b32.xlu0 %v1170, 16
          %v1176 = vpop.permute.xlu0 %1175
          %vm1177 = vcmp.lt.s32.totalorder %v364, 16
          %v1178 = vsel %vm1177, %v1174, %v1176
          %v1179 = vsel %vm1177, %v1176, %v1174
          %v1182 = vcombine.low %v1179, %v1178
          %v1184 = vunpack.c.l.s4 1966171168
          %v1185 = vunpack.c.0.s8 %v1184
          %v1186 = vlaneseq
          %v1187 = vshrl.u32 %v1186, 7
          %v1188 = vsub.s32 %v1185, %v1187
          %v1189 = vrot.slane %v1182, %v1188
          %v1191 = vunpack.c.l.s4 1966171168
          %v1192 = vunpack.c.0.s8 %v1191
          %v1193 = vlaneseq
          %v1194 = vshrl.u32 %v1193, 7
          %v1195 = vsub.s32 %v1192, %v1194
          %v1196 = vrot.slane %v1189, %v1195
          %v1198 = vsel %vm1161, %v1196, 0.0
          %v1199 = vadd.f32 %v1158, %v1198
          %v1200 = vadd.f32 %v1199, %v1053
          %vm1201 = vcmp.ge.s32.totalorder %v344, 4294967295
          %vm1202 = vcmp.lt.s32.totalorder %v344, 15
          %vm1203 = vmand %vm1201, %vm1202
          %v1205 = vlaneseq
          %v1206 = vshrl.u32 %v1205, 7
          %v1207 = vsub.s32 0, %v1206
          %v1208 = vrot.slane %v1061, %v1207
          %v1209 = vlaneseq
          %v1210 = vshrl.u32 %v1209, 7
          %v1211 = vsub.s32 1, %v1210
          %v1212 = vrot.slane %v1061, %v1211
          %1215 = vrot.lane.b32.xlu0 %v1208, 112
          %v1216 = vpop.permute.xlu0 %1215
          %1217 = vrot.lane.b32.xlu0 %v1212, 112
          %v1218 = vpop.permute.xlu0 %1217
          %vm1219 = vcmp.lt.s32.totalorder %v364, 112
          %v1220 = vsel %vm1219, %v1216, %v1218
          %v1221 = vsel %vm1219, %v1218, %v1216
          %v1224 = vcombine.low %v1220, %v1221
          %v1226 = vunpack.c.l.s4 1966171168
          %v1227 = vunpack.c.0.s8 %v1226
          %v1228 = vlaneseq
          %v1229 = vshrl.u32 %v1228, 7
          %v1230 = vsub.s32 %v1227, %v1229
          %v1231 = vrot.slane %v1224, %v1230
          %v1233 = vunpack.c.l.s4 1966171168
          %v1234 = vunpack.c.0.s8 %v1233
          %v1235 = vlaneseq
          %v1236 = vshrl.u32 %v1235, 7
          %v1237 = vsub.s32 %v1234, %v1236
          %v1238 = vrot.slane %v1231, %v1237
          %v1240 = vsel %vm1203, %v1238, 0.0
          %v1241 = vadd.f32 %v1200, %v1240
          %vm1242 = vcmp.ge.s32.totalorder %v344, 4294967294
          %vm1243 = vcmp.lt.s32.totalorder %v344, 14
          %vm1244 = vmand %vm1242, %vm1243
          %v1246 = vlaneseq
          %v1247 = vshrl.u32 %v1246, 7
          %v1248 = vsub.s32 0, %v1247
          %v1249 = vrot.slane %v1069, %v1248
          %v1250 = vlaneseq
          %v1251 = vshrl.u32 %v1250, 7
          %v1252 = vsub.s32 1, %v1251
          %v1253 = vrot.slane %v1069, %v1252
          %1256 = vrot.lane.b32.xlu0 %v1249, 96
          %v1257 = vpop.permute.xlu0 %1256
          %1258 = vrot.lane.b32.xlu0 %v1253, 96
          %v1259 = vpop.permute.xlu0 %1258
          %vm1260 = vcmp.lt.s32.totalorder %v364, 96
          %v1261 = vsel %vm1260, %v1257, %v1259
          %v1262 = vsel %vm1260, %v1259, %v1257
          %v1265 = vcombine.low %v1261, %v1262
          %v1267 = vunpack.c.l.s4 1966171168
          %v1268 = vunpack.c.0.s8 %v1267
          %v1269 = vlaneseq
          %v1270 = vshrl.u32 %v1269, 7
          %v1271 = vsub.s32 %v1268, %v1270
          %v1272 = vrot.slane %v1265, %v1271
          %v1274 = vunpack.c.l.s4 1966171168
          %v1275 = vunpack.c.0.s8 %v1274
          %v1276 = vlaneseq
          %v1277 = vshrl.u32 %v1276, 7
          %v1278 = vsub.s32 %v1275, %v1277
          %v1279 = vrot.slane %v1272, %v1278
          %v1281 = vsel %vm1244, %v1279, 0.0
          %v1282 = vadd.f32 %v1241, %v1281
          %vm1283 = vcmp.ge.s32.totalorder %v344, 4294967293
          %vm1284 = vcmp.lt.s32.totalorder %v344, 13
          %vm1285 = vmand %vm1283, %vm1284
          %v1287 = vlaneseq
          %v1288 = vshrl.u32 %v1287, 7
          %v1289 = vsub.s32 0, %v1288
          %v1290 = vrot.slane %v1077, %v1289
          %v1291 = vlaneseq
          %v1292 = vshrl.u32 %v1291, 7
          %v1293 = vsub.s32 1, %v1292
          %v1294 = vrot.slane %v1077, %v1293
          %1297 = vrot.lane.b32.xlu0 %v1290, 80
          %v1298 = vpop.permute.xlu0 %1297
          %1299 = vrot.lane.b32.xlu0 %v1294, 80
          %v1300 = vpop.permute.xlu0 %1299
          %vm1301 = vcmp.lt.s32.totalorder %v364, 80
          %v1302 = vsel %vm1301, %v1298, %v1300
          %v1303 = vsel %vm1301, %v1300, %v1298
          %v1306 = vcombine.low %v1302, %v1303
          %v1308 = vunpack.c.l.s4 1966171168
          %v1309 = vunpack.c.0.s8 %v1308
          %v1310 = vlaneseq
          %v1311 = vshrl.u32 %v1310, 7
          %v1312 = vsub.s32 %v1309, %v1311
          %v1313 = vrot.slane %v1306, %v1312
          %v1315 = vunpack.c.l.s4 1966171168
          %v1316 = vunpack.c.0.s8 %v1315
          %v1317 = vlaneseq
          %v1318 = vshrl.u32 %v1317, 7
          %v1319 = vsub.s32 %v1316, %v1318
          %v1320 = vrot.slane %v1313, %v1319
          %v1322 = vsel %vm1285, %v1320, 0.0
          %v1323 = vadd.f32 %v1282, %v1322
          %v1324 = vxor.u32 %v1323, 2147483648
          %v1325 = vmul.f32 %v1324, 1.442695
          %v1326 = vpow.pop %v1325
          %v1327 = vadd.f32 %v1326, 1.0
          %v1328 = vrcp.pop %v1327
          %v1329 = vmul.f32 1.0, %v1328
          %v1330 = vlaneseq
          %vm1331 = vcmp.ge.s32.totalorder %v1330, 0
          %vm1332 = vcmp.lt.s32.totalorder %v1330, 256
          %vm1333 = vmand %vm1331, %vm1332
          %1334 = vst.msk [vmem:[%s207] sm:$0x3] %vm1333, %v1329
        $region48: #{tpu_custom_call.1} parent=31 // pred_fallthru
          _
        %s1335 = sand.u32 %s115, 1
        %s1336 = scalar_lea.sflag [#allocation8], %s1335
        %s1337 = sand.u32 %s115, 1
        %s1338 = smul.addr %s1337, 2
        %s1339 = scalar_lea.vmem [#allocation9], %s1338
        // Predicated region
        $region49: #{tpu_custom_call.1} parent=31 // pred_check
          %p1340 = pneg %p125
        $region50: #{tpu_custom_call.1} parent=31 // pred_check_branch
          %1342 = sbr.rel (%p1340) target = $region52
        $region51: #{tpu_custom_call.1} parent=31 // pred_region
          %s1344 = ssub.s32 32, 32
          %1345 = vsyncadd %s1336, %s1344
          %s1346 = smul.addr %s29, 2
          %s1347 = smul.addr %s1346, 16
          %s1348 = scalar_lea.hbm %s4, %s1347
          %s1350 = sshll.u32 %s1339, 4
          %s1351 = int_to_ptr.vmem [resolvable:$true] %s1350
          %1353 = dma.vmem_to_hbm [thread:$0]  %s1351, 32, %s1348, %s1336
        $region52: #{tpu_custom_call.1} parent=31 // pred_fallthru
          _
      $region32: #{tpu_custom_call.1} parent=5 // pred_fallthru
        _
      %p1354 = scmp.le.s32.totalorder 2, %s20
      // Predicated region
      $region53: #{tpu_custom_call.1} parent=5 // pred_check
        %p1355 = pneg %p1354
      $region54: #{tpu_custom_call.1} parent=5 // pred_check_branch
        %1357 = sbr.rel (%p1355) target = $region56
      $region55: #{tpu_custom_call.1} parent=5 // pred_region
        %s1358 = ssub.s32 %s20, 2
        // Predicated region
        $region57: #{tpu_custom_call.1} parent=55 // pred_check
          %p1359 = pneg %p131
        $region58: #{tpu_custom_call.1} parent=55 // pred_check_branch
          %1361 = sbr.rel (%p1359) target = $region60
        $region59: #{tpu_custom_call.1} parent=55 // pred_region
          %s1362 = sand.u32 %s116, 1
          %s1363 = scalar_lea.sflag [#allocation8], %s1362
          %s1364 = sand.u32 %s116, 1
          %s1365 = smul.addr %s1364, 2
          %s1366 = scalar_lea.vmem [#allocation9], %s1365
          %1367 = dma.done %s1363, 32
        $region60: #{tpu_custom_call.1} parent=55 // pred_fallthru
          _
      $region56: #{tpu_custom_call.1} parent=5 // pred_fallthru
        _
    $region6: #{tpu_custom_call.1} parent=1 // loop_footer
      %s24 = sadd.s32 1, %s20
    $region7: #{tpu_custom_call.1} parent=1 // loop_footer_branch
      %19 = sbr.rel target = $region3
    $region8: #{tpu_custom_call.1} parent=1 // loop_exit
      _
    %1368 = vsyncpa [#allocation7], 1
    %s1369 = scalar_lea.sflag [#allocation7], 1
    %1370 = vsyncpa %s1369, 1
    %1371 = vsyncpa [#allocation8], 1
    %s1372 = scalar_lea.sflag [#allocation8], 1
    %1373 = vsyncpa %s1372, 1

</llo_original>
